<compile_context>
chip_gen: v5e
topology: v5e:2x2
jax: 0.10.0
libtpu: 0.0.40
codegen_flags: <defaults>
</compile_context>

<pallas_src>
import jax
import jax.numpy as jnp
from jax import lax
from jax.experimental import pallas as pl
from jax.experimental.pallas import tpu as pltpu


def _round_up(v, m):
    return (v + m - 1) // m * m


def _pad_last(w, new):
    pads = [(0, 0)] * (w.ndim - 1) + [(0, new - w.shape[-1])]
    return jnp.pad(w, pads)


def _pad_axis(w, axis, new):
    pads = [(0, 0)] * w.ndim
    pads[axis] = (0, new - w.shape[axis])
    return jnp.pad(w, pads)


def _pad_gates(w, H, Hp):
    """Pad the trailing 4*H ([i|f|g|o]) axis to 4*Hp, per gate block."""
    lead = w.shape[:-1]
    w4 = w.reshape(lead + (4, H))
    w4 = _pad_last(w4, Hp)
    return w4.reshape(lead + (4 * Hp,))


def lstm_decoder_forward(x, params, n_layers, *, t_chunk=None,
                         weight_dtype=jnp.bfloat16, num_batch_shards=1,
                         unroll=2):
    """x: (B, T, E) float32.  Returns (out (B, C), h (n_layers, B, H))."""
    B, T, E = x.shape
    H = params["whh0_t"].shape[0]
    C = params["wfc_t"].shape[1]

    wdt = weight_dtype
    wsize = jnp.dtype(wdt).itemsize
    multi = n_layers > 1

    Hp = _round_up(H, 128)            # lane-aligned hidden / gate blocks
    Cp = _round_up(C, 128)            # lane-dense fc1 output
    bp_align = 16 if wsize == 2 else 8   # bf16 xg packs 16 rows per sublane tile
    Bp = _round_up(B, bp_align)
    if Bp % num_batch_shards:
        raise ValueError("num_batch_shards must divide padded batch")
    B_sh = Bp // num_batch_shards
    if B_sh % bp_align:
        raise ValueError("batch shard must be a multiple of %d" % bp_align)

    # ---- generation-aware VMEM budget --------------------------------------
    try:
        vmem_cap = int(pltpu.get_tpu_info().vmem_capacity_bytes)
    except Exception:
        vmem_cap = 64 << 20                      # v7x per-core floor
    budget = int(vmem_cap * 0.6)

    wbytes = Hp * 4 * Hp * wsize                              # whh0 (Buffered(1))
    if multi:
        wbytes += 2 * (n_layers - 1) * Hp * 4 * Hp * wsize    # wihr + whhr
        wbytes += (n_layers - 1) * 4 * Hp * 4                 # brest (f32)
    wbytes += Hp * Cp * wsize + Cp * 4                        # fc1
    scratch_bytes = 2 * n_layers * B_sh * Hp * 4
    out_bytes = 2 * (B_sh * Cp + n_layers * B_sh * Hp) * 4
    fixed = wbytes + scratch_bytes + out_bytes + (2 << 20)    # + margin
    xg_step_bytes = B_sh * 4 * Hp * wsize                     # per timestep
    cap = max(16, (budget - fixed) // (2 * xg_step_bytes))    # 2 xg buffers
    cap = int(min(cap, 128, T))

    if t_chunk is None:
        if T <= cap:
            t_chunk = T
        else:
            # prefer a divisor of T (static trip count, no tail); otherwise a
            # full-size chunk with a dynamic trip count in the tail chunk.
            t_chunk = next((d for d in range(cap, 0, -1) if T % d == 0), cap)
            if t_chunk < max(8, cap // 2):
                t_chunk = cap
    n_chunks = -(-T // t_chunk)
    T_pad = n_chunks * t_chunk
    static_steps = (T_pad == T)

    need = fixed + 2 * t_chunk * xg_step_bytes
    vmem_limit = int(max(min(vmem_cap * 3 // 4, 96 << 20), need + (4 << 20)))

    # ---- weight prep: pad to lane-aligned shapes (zero padding preserves the
    #      recurrence: padded h/c lanes stay exactly 0), cast to weight dtype --
    wih0 = _pad_gates(params["wih0_t"], H, Hp)                            # (E, 4Hp)
    b0 = _pad_gates(params["b"][0], H, Hp)                                # (1, 4Hp)
    whh0 = _pad_axis(_pad_gates(params["whh0_t"], H, Hp), 0, Hp).astype(wdt)    # (Hp, 4Hp)
    if multi:
        wihr = _pad_axis(_pad_gates(params["wihr_t"], H, Hp), 1, Hp).astype(wdt)  # (L-1, Hp, 4Hp)
        whhr = _pad_axis(_pad_gates(params["whhr_t"], H, Hp), 1, Hp).astype(wdt)  # (L-1, Hp, 4Hp)
        brest = _pad_gates(params["b"][1:], H, Hp)                        # (L-1, 1, 4Hp) f32
    wfc = _pad_last(_pad_axis(params["wfc_t"], 0, Hp), Cp).astype(wdt)    # (Hp, Cp)
    bfc = _pad_last(params["bfc"], Cp)                                    # (1, Cp) f32

    # ---- hoisted layer-0 input projection: ONE big (T*B, E) @ (E, 4Hp);
    #      bias folded in, then stored in the weight dtype (bf16 fast path) ---
    x_tm = jnp.transpose(x, (1, 0, 2))                                    # (T, B, E)
    x_tm = jnp.pad(x_tm, ((0, T_pad - T), (0, Bp - B), (0, 0)))
    xg = (jnp.dot(x_tm.reshape(T_pad * Bp, E).astype(wdt), wih0.astype(wdt),
                  preferred_element_type=jnp.float32) + b0).astype(wdt)
    xg = xg.reshape(T_pad, Bp, 4 * Hp)

    def kernel(*refs):
        if multi:
            (xg_ref, whh0_ref, wihr_ref, whhr_ref, brest_ref,
             wfc_ref, bfc_ref, out_ref, h_out_ref, h_scr, c_scr) = refs
        else:
            (xg_ref, whh0_ref, wfc_ref, bfc_ref,
             out_ref, h_out_ref, h_scr, c_scr) = refs
        chunk = pl.program_id(1)

        @pl.when(chunk == 0)
        def _():
            h_scr[...] = jnp.zeros_like(h_scr)
            c_scr[...] = jnp.zeros_like(c_scr)

        # Recurrent state lives in vregs across the in-chunk time loop; the
        # VMEM scratch is touched exactly once per chunk on each side.
        carry0 = (tuple(h_scr[l] for l in range(n_layers))
                  + tuple(c_scr[l] for l in range(n_layers)))
        # Hoisted per-chunk bias loads for layers >= 1 (not re-read per step).
        if multi:
            b_rest = [brest_ref[l] for l in range(n_layers - 1)]   # (1, 4Hp)

        def sig(v):                     # one EUP op instead of exp + divide
            return 0.5 * (jnp.tanh(0.5 * v) + 1.0)

        def step(tl, carry):
            hs = list(carry[:n_layers])
            cs = list(carry[n_layers:])
            inp = None
            for l in range(n_layers):              # static, unrolled layers
                h_prev = hs[l]
                c_prev = cs[l]
                if l == 0:
                    # x-projection (incl. bias) precomputed; only the
                    # recurrent dot sits on the serial path here.
                    gates = (xg_ref[tl].astype(jnp.float32)
                             + jnp.dot(h_prev.astype(wdt), whh0_ref[...],
                                       preferred_element_type=jnp.float32))
                else:
                    # two dots (no per-step concat copy); same total MXU work.
                    gates = (jnp.dot(inp, wihr_ref[l - 1],
                                     preferred_element_type=jnp.float32)
                             + jnp.dot(h_prev.astype(wdt), whhr_ref[l - 1],
                                       preferred_element_type=jnp.float32)
                             + b_rest[l - 1])
                i_g = sig(gates[:, 0 * Hp:1 * Hp])
                f_g = sig(gates[:, 1 * Hp:2 * Hp])
                g_g = jnp.tanh(gates[:, 2 * Hp:3 * Hp])
                o_g = sig(gates[:, 3 * Hp:4 * Hp])
                c_new = f_g * c_prev + i_g * g_g
                h_new = o_g * jnp.tanh(c_new)
                hs[l] = h_new
                cs[l] = c_new
                inp = h_new.astype(wdt)            # feeds the next layer
            return tuple(hs) + tuple(cs)

        if static_steps:
            # hand-unrolled time loop: u steps per fori iteration (cross-step
            # ILP visible to the scheduler), static remainder after the loop.
            u = max(1, min(int(unroll), t_chunk))
            n_main = t_chunk // u

            def block(bi, carry):
                for j in range(u):
                    carry = step(bi * u + j, carry)
                return carry

            carry = lax.fori_loop(0, n_main, block, carry0)
            for j in range(t_chunk - n_main * u):
                carry = step(n_main * u + j, carry)
        else:
            # tail chunk handled with a dynamic trip count — no per-step masks.
            steps = jnp.minimum(t_chunk, T - chunk * t_chunk)
            carry = lax.fori_loop(0, steps, step, carry0)

        for l in range(n_layers):
            h_scr[l] = carry[l]
            c_scr[l] = carry[n_layers + l]

        @pl.when(chunk == pl.num_programs(1) - 1)
        def _():
            for l in range(n_layers):
                h_out_ref[l] = carry[l]
            # out = fc1(out[:, -1, :]); last-step top-layer hidden == out[:,-1,:]
            out_ref[...] = (jnp.dot(carry[n_layers - 1].astype(wdt),
                                    wfc_ref[...],
                                    preferred_element_type=jnp.float32)
                            + bfc_ref[...])

    # Constant-index weights: single-buffered (halves their resident VMEM).
    const = pl.Buffered(1)
    in_specs = [
        pl.BlockSpec((t_chunk, B_sh, 4 * Hp), lambda b, c: (c, b, 0)),
        pl.BlockSpec((Hp, 4 * Hp), lambda b, c: (0, 0), pipeline_mode=const),
    ]
    inputs = [xg, whh0]
    if multi:
        in_specs += [
            pl.BlockSpec((n_layers - 1, Hp, 4 * Hp), lambda b, c: (0, 0, 0),
                         pipeline_mode=const),
            pl.BlockSpec((n_layers - 1, Hp, 4 * Hp), lambda b, c: (0, 0, 0),
                         pipeline_mode=const),
            pl.BlockSpec((n_layers - 1, 1, 4 * Hp), lambda b, c: (0, 0, 0),
                         pipeline_mode=const),
        ]
        inputs += [wihr, whhr, brest]
    in_specs += [
        pl.BlockSpec((Hp, Cp), lambda b, c: (0, 0), pipeline_mode=const),
        pl.BlockSpec((1, Cp), lambda b, c: (0, 0), pipeline_mode=const),
    ]
    inputs += [wfc, bfc]

    out_shape = (jax.ShapeDtypeStruct((Bp, Cp), jnp.float32),
                 jax.ShapeDtypeStruct((n_layers, Bp, Hp), jnp.float32))
    out_specs = (pl.BlockSpec((B_sh, Cp), lambda b, c: (b, 0)),
                 pl.BlockSpec((n_layers, B_sh, Hp), lambda b, c: (0, b, 0)))

    out_p, h_p = pl.pallas_call(
        kernel,
        grid=(num_batch_shards, n_chunks),
        in_specs=in_specs,
        out_specs=out_specs,
        out_shape=out_shape,
        scratch_shapes=[pltpu.VMEM((n_layers, B_sh, Hp), jnp.float32),
                        pltpu.VMEM((n_layers, B_sh, Hp), jnp.float32)],
        compiler_params=pltpu.CompilerParams(
            dimension_semantics=("parallel", "arbitrary"),
            vmem_limit_bytes=vmem_limit),
    )(*inputs)

    return out_p[:B, :C], h_p[:, :B, :H]


def init_params(key, embed_dim, hidden_dim, channel_out, n_layers):
    """Deterministic PyTorch-style init (uniform(-1/sqrt(H), 1/sqrt(H)))."""
    H = hidden_dim
    k = 1.0 / float(H) ** 0.5
    keys = iter(jax.random.split(key, 4 * n_layers + 2))

    def u(kk, shape):
        return jax.random.uniform(kk, shape, jnp.float32, -k, k)

    wih_list, whh_list, b_list = [], [], []
    for l in range(n_layers):
        in_dim = embed_dim if l == 0 else H
        w_ih = u(next(keys), (4 * H, in_dim))
        w_hh = u(next(keys), (4 * H, H))
        b_ih = u(next(keys), (4 * H,))
        b_hh = u(next(keys), (4 * H,))
        wih_list.append(w_ih)
        whh_list.append(w_hh)
        b_list.append((b_ih + b_hh).reshape(1, 4 * H))

    w_fc = u(next(keys), (channel_out, H))
    b_fc = u(next(keys), (channel_out,))

    params = {
        "wih0_t": wih_list[0].T,                           # (E, 4H)
        "whh0_t": whh_list[0].T,                           # (H, 4H)
        "b": jnp.concatenate(b_list, axis=0).reshape(n_layers, 1, 4 * H),
        "wfc_t": w_fc.T,                                   # (H, C)
        "bfc": b_fc.reshape(1, channel_out),
    }
    if n_layers > 1:
        params["wihr_t"] = jnp.stack([w.T for w in wih_list[1:]])   # (L-1, H, 4H)
        params["whhr_t"] = jnp.stack([w.T for w in whh_list[1:]])   # (L-1, H, 4H)
    return params


def lstm_decoder_ref(x, params, n_layers):
    """Pure-JAX f32 reference of the PyTorch forward (no attention, unidir)."""
    B, T, E = x.shape
    H = params["whh0_t"].shape[0]
    h = jnp.zeros((n_layers, B, H), jnp.float32)
    c = jnp.zeros((n_layers, B, H), jnp.float32)
    inp = None
    for t in range(T):
        inp = x[:, t, :]
        for l in range(n_layers):
            wih = params["wih0_t"] if l == 0 else params["wihr_t"][l - 1]
            whh = params["whh0_t"] if l == 0 else params["whhr_t"][l - 1]
            b = params["b"][l]
            gates = inp @ wih + h[l] @ whh + b
            i_g = jax.nn.sigmoid(gates[:, :H])
            f_g = jax.nn.sigmoid(gates[:, H:2 * H])
            g_g = jnp.tanh(gates[:, 2 * H:3 * H])
            o_g = jax.nn.sigmoid(gates[:, 3 * H:])
            c_new = f_g * c[l] + i_g * g_g
            h_new = o_g * jnp.tanh(c_new)
            h = h.at[l].set(h_new)
            c = c.at[l].set(c_new)
            inp = h_new
    out = inp @ params["wfc_t"] + params["bfc"]
    return out, h


# TODO(synk): bidirectional=True and attention=True branches are not
# implemented (module defaults are False); the unused self.a_fn is omitted
# because forward() never applies it.

if __name__ == "__main__":
    B, T = 2, 8
    embed_dim, hidden_dim, channel_out, n_layers = 16, 32, 4, 2

    key = jax.random.PRNGKey(0)
    kx, kp = jax.random.split(key)
    x = jax.random.normal(kx, (B, T, embed_dim), jnp.float32)
    params = init_params(kp, embed_dim, hidden_dim, channel_out, n_layers)

    out_ref_, h_ref_ = lstm_decoder_ref(x, params, n_layers)

    # exact-semantics check (f32 weights, single chunk)
    out32, h32 = lstm_decoder_forward(x, params, n_layers,
                                      weight_dtype=jnp.float32)
    jax.block_until_ready((out32, h32))
    assert jnp.allclose(out32, out_ref_, atol=1e-3, rtol=1e-3), "out mismatch (f32)"
    assert jnp.allclose(h32, h_ref_, atol=1e-3, rtol=1e-3), "h mismatch (f32)"

    # multi-chunk path: validates cross-chunk state carry through VMEM scratch
    out32c, h32c = lstm_decoder_forward(x, params, n_layers, t_chunk=4,
                                        weight_dtype=jnp.float32)
    jax.block_until_ready((out32c, h32c))
    assert jnp.allclose(out32c, out_ref_, atol=1e-3, rtol=1e-3), "out mismatch (chunked)"
    assert jnp.allclose(h32c, h_ref_, atol=1e-3, rtol=1e-3), "h mismatch (chunked)"

    # MXU-native bf16 fast path (bf16 weights + bf16 xg stream)
    out, h = lstm_decoder_forward(x, params, n_layers,
                                  weight_dtype=jnp.bfloat16)
    jax.block_until_ready((out, h))
    assert jnp.allclose(out, out_ref_, atol=5e-2, rtol=5e-2), "out mismatch (bf16)"
    assert jnp.allclose(h, h_ref_, atol=5e-2, rtol=5e-2), "h mismatch (bf16)"

    # single-layer configuration (exercises the n_layers == 1 ref layout)
    params1 = init_params(kp, embed_dim, hidden_dim, channel_out, 1)
    o1_ref, h1_ref = lstm_decoder_ref(x, params1, 1)
    o1, h1 = lstm_decoder_forward(x, params1, 1, weight_dtype=jnp.float32)
    jax.block_until_ready((o1, h1))
    assert jnp.allclose(o1, o1_ref, atol=1e-3, rtol=1e-3), "out mismatch (L=1)"
    assert jnp.allclose(h1, h1_ref, atol=1e-3, rtol=1e-3), "h mismatch (L=1)"

    print("KERNEL_OK")
</pallas_src>

<mosaic_0001>
module attributes {stable_mosaic.version = 11 : i64} {
  func.func @kernel(%arg0: i32, %arg1: i32, %arg2: memref<8x8x512xf32, #tpu.memory_space<vmem>>, %arg3: memref<128x512xf32, #tpu.memory_space<vmem>>, %arg4: memref<1x128x512xf32, #tpu.memory_space<vmem>>, %arg5: memref<1x128x512xf32, #tpu.memory_space<vmem>>, %arg6: memref<1x1x512xf32, #tpu.memory_space<vmem>>, %arg7: memref<128x128xf32, #tpu.memory_space<vmem>>, %arg8: memref<1x128xf32, #tpu.memory_space<vmem>>, %arg9: memref<8x128xf32, #tpu.memory_space<vmem>>, %arg10: memref<2x8x128xf32, #tpu.memory_space<vmem>>, %arg11: memref<2x8x128xf32, #tpu.memory_space<vmem>>, %arg12: memref<2x8x128xf32, #tpu.memory_space<vmem>>) attributes {dimension_semantics = [#tpu.dimension_semantics<parallel>, #tpu.dimension_semantics<arbitrary>], iteration_bounds = array<i64: 1, 1>, scalar_prefetch = 0 : i64, scratch_operands = 2 : i64, tpu.core_type = #tpu.core_type<tc>, window_params = [{transform_indices = @transform_0, window_bounds = array<i64: 8, 8, 512>}, {pipeline_mode = #tpu.pipeline_mode<synchronous>, transform_indices = @transform_1, window_bounds = array<i64: 128, 512>}, {pipeline_mode = #tpu.pipeline_mode<synchronous>, transform_indices = @transform_2, window_bounds = array<i64: 1, 128, 512>}, {pipeline_mode = #tpu.pipeline_mode<synchronous>, transform_indices = @transform_3, window_bounds = array<i64: 1, 128, 512>}, {pipeline_mode = #tpu.pipeline_mode<synchronous>, transform_indices = @transform_4, window_bounds = array<i64: 1, 1, 512>}, {pipeline_mode = #tpu.pipeline_mode<synchronous>, transform_indices = @transform_5, window_bounds = array<i64: 128, 128>}, {pipeline_mode = #tpu.pipeline_mode<synchronous>, transform_indices = @transform_6, window_bounds = array<i64: 1, 128>}, {transform_indices = @transform_7, window_bounds = array<i64: 8, 128>}, {transform_indices = @transform_8, window_bounds = array<i64: 2, 8, 128>}]} {
    %c0_i32 = arith.constant 0 : i32
    %0 = arith.cmpi eq, %arg1, %c0_i32 : i32
    %1 = arith.extui %0 : i1 to i32
    %c0_i32_0 = arith.constant 0 : i32
    %2 = arith.cmpi ne, %1, %c0_i32_0 : i32
    scf.if %2 {
      %cst = arith.constant 0.000000e+00 : f32
      %30 = vector.broadcast %cst : f32 to vector<2x8x128xf32>
      %c0_30 = arith.constant 0 : index
      %c0_31 = arith.constant 0 : index
      %c0_32 = arith.constant 0 : index
      %31 = vector.load %arg11[%c0_30, %c0_31, %c0_32] : memref<2x8x128xf32, #tpu.memory_space<vmem>>, vector<2x8x128xf32>
      tpu.vector_store %arg11[%c0_30, %c0_31, %c0_32], %30 {strides = array<i32>} : memref<2x8x128xf32, #tpu.memory_space<vmem>>, vector<2x8x128xf32>,
      %cst_33 = arith.constant 0.000000e+00 : f32
      %32 = vector.broadcast %cst_33 : f32 to vector<2x8x128xf32>
      %c0_34 = arith.constant 0 : index
      %c0_35 = arith.constant 0 : index
      %c0_36 = arith.constant 0 : index
      %33 = vector.load %arg12[%c0_34, %c0_35, %c0_36] : memref<2x8x128xf32, #tpu.memory_space<vmem>>, vector<2x8x128xf32>
      tpu.vector_store %arg12[%c0_34, %c0_35, %c0_36], %32 {strides = array<i32>} : memref<2x8x128xf32, #tpu.memory_space<vmem>>, vector<2x8x128xf32>,
    } else {
    }
    %c0 = arith.constant 0 : index
    %c0_1 = arith.constant 0 : index
    %c0_2 = arith.constant 0 : index
    %3 = vector.load %arg11[%c0, %c0_1, %c0_2] : memref<2x8x128xf32, #tpu.memory_space<vmem>>, vector<1x8x128xf32>
    %4 = vector.shape_cast %3 : vector<1x8x128xf32> to vector<8x128xf32>
    %c1 = arith.constant 1 : index
    %c0_3 = arith.constant 0 : index
    %c0_4 = arith.constant 0 : index
    %5 = vector.load %arg11[%c1, %c0_3, %c0_4] : memref<2x8x128xf32, #tpu.memory_space<vmem>>, vector<1x8x128xf32>
    %6 = vector.shape_cast %5 : vector<1x8x128xf32> to vector<8x128xf32>
    %c0_5 = arith.constant 0 : index
    %c0_6 = arith.constant 0 : index
    %c0_7 = arith.constant 0 : index
    %7 = vector.load %arg12[%c0_5, %c0_6, %c0_7] : memref<2x8x128xf32, #tpu.memory_space<vmem>>, vector<1x8x128xf32>
    %8 = vector.shape_cast %7 : vector<1x8x128xf32> to vector<8x128xf32>
    %c1_8 = arith.constant 1 : index
    %c0_9 = arith.constant 0 : index
    %c0_10 = arith.constant 0 : index
    %9 = vector.load %arg12[%c1_8, %c0_9, %c0_10] : memref<2x8x128xf32, #tpu.memory_space<vmem>>, vector<1x8x128xf32>
    %10 = vector.shape_cast %9 : vector<1x8x128xf32> to vector<8x128xf32>
    %c0_11 = arith.constant 0 : index
    %c0_12 = arith.constant 0 : index
    %c0_13 = arith.constant 0 : index
    %11 = vector.load %arg6[%c0_11, %c0_12, %c0_13] : memref<1x1x512xf32, #tpu.memory_space<vmem>>, vector<1x1x512xf32>
    %12 = vector.shape_cast %11 : vector<1x1x512xf32> to vector<1x512xf32>
    %c0_i32_14 = arith.constant 0 : i32
    %c4_i32 = arith.constant 4 : i32
    %13 = arith.addi %c0_i32_14, %c4_i32 : i32
    %c1_i32 = arith.constant 1 : i32
    %14:4 = scf.for %arg13 = %c0_i32_14 to %13 step %c1_i32 iter_args(%arg14 = %4, %arg15 = %6, %arg16 = %8, %arg17 = %10) -> (vector<8x128xf32>, vector<8x128xf32>, vector<8x128xf32>, vector<8x128xf32>)  : i32 {
      %c2_i32 = arith.constant 2 : i32
      %30 = arith.muli %arg13, %c2_i32 : i32
      %c0_i32_30 = arith.constant 0 : i32
      %31 = arith.addi %30, %c0_i32_30 : i32
      %32 = arith.index_cast %31 : i32 to index
      %c0_31 = arith.constant 0 : index
      %c0_32 = arith.constant 0 : index
      %33 = vector.load %arg2[%32, %c0_31, %c0_32] : memref<8x8x512xf32, #tpu.memory_space<vmem>>, vector<1x8x512xf32>
      %34 = vector.shape_cast %33 : vector<1x8x512xf32> to vector<8x512xf32>
      %c0_33 = arith.constant 0 : index
      %c0_34 = arith.constant 0 : index
      %35 = vector.load %arg3[%c0_33, %c0_34] : memref<128x512xf32, #tpu.memory_space<vmem>>, vector<128x512xf32>
      %cst = arith.constant dense<0.000000e+00> : vector<8x512xf32>
      %36 = tpu.matmul %arg14, %35, %cst {dimension_numbers = #tpu.dot_dimension_numbers<[1], [0], [0], [1], [0, 0, 1, 1], [], []>} : vector<8x128xf32>, vector<128x512xf32>, vector<8x512xf32> -> vector<8x512xf32>
      %37 = arith.addf %34, %36 : vector<8x512xf32>
      %38 = vector.extract_strided_slice %37 {offsets = [0, 0], sizes = [8, 128], strides = [1, 1]} : vector<8x512xf32> to vector<8x128xf32>
      %cst_35 = arith.constant 5.000000e-01 : f32
      %39 = vector.broadcast %cst_35 : f32 to vector<8x128xf32>
      %40 = arith.mulf %39, %38 : vector<8x128xf32>
      %41 = math.tanh %40 : vector<8x128xf32>
      %cst_36 = arith.constant 1.000000e+00 : f32
      %42 = vector.broadcast %cst_36 : f32 to vector<8x128xf32>
      %43 = arith.addf %41, %42 : vector<8x128xf32>
      %cst_37 = arith.constant 5.000000e-01 : f32
      %44 = vector.broadcast %cst_37 : f32 to vector<8x128xf32>
      %45 = arith.mulf %44, %43 : vector<8x128xf32>
      %46 = vector.extract_strided_slice %37 {offsets = [0, 128], sizes = [8, 128], strides = [1, 1]} : vector<8x512xf32> to vector<8x128xf32>
      %cst_38 = arith.constant 5.000000e-01 : f32
      %47 = vector.broadcast %cst_38 : f32 to vector<8x128xf32>
      %48 = arith.mulf %47, %46 : vector<8x128xf32>
      %49 = math.tanh %48 : vector<8x128xf32>
      %cst_39 = arith.constant 1.000000e+00 : f32
      %50 = vector.broadcast %cst_39 : f32 to vector<8x128xf32>
      %51 = arith.addf %49, %50 : vector<8x128xf32>
      %cst_40 = arith.constant 5.000000e-01 : f32
      %52 = vector.broadcast %cst_40 : f32 to vector<8x128xf32>
      %53 = arith.mulf %52, %51 : vector<8x128xf32>
      %54 = vector.extract_strided_slice %37 {offsets = [0, 256], sizes = [8, 128], strides = [1, 1]} : vector<8x512xf32> to vector<8x128xf32>
      %55 = math.tanh %54 : vector<8x128xf32>
      %56 = vector.extract_strided_slice %37 {offsets = [0, 384], sizes = [8, 128], strides = [1, 1]} : vector<8x512xf32> to vector<8x128xf32>
      %cst_41 = arith.constant 5.000000e-01 : f32
      %57 = vector.broadcast %cst_41 : f32 to vector<8x128xf32>
      %58 = arith.mulf %57, %56 : vector<8x128xf32>
      %59 = math.tanh %58 : vector<8x128xf32>
      %cst_42 = arith.constant 1.000000e+00 : f32
      %60 = vector.broadcast %cst_42 : f32 to vector<8x128xf32>
      %61 = arith.addf %59, %60 : vector<8x128xf32>
      %cst_43 = arith.constant 5.000000e-01 : f32
      %62 = vector.broadcast %cst_43 : f32 to vector<8x128xf32>
      %63 = arith.mulf %62, %61 : vector<8x128xf32>
      %64 = arith.mulf %53, %arg16 : vector<8x128xf32>
      %65 = arith.mulf %45, %55 : vector<8x128xf32>
      %66 = arith.addf %64, %65 : vector<8x128xf32>
      %67 = math.tanh %66 : vector<8x128xf32>
      %68 = arith.mulf %63, %67 : vector<8x128xf32>
      %c0_44 = arith.constant 0 : index
      %c0_45 = arith.constant 0 : index
      %c0_46 = arith.constant 0 : index
      %69 = vector.load %arg4[%c0_44, %c0_45, %c0_46] : memref<1x128x512xf32, #tpu.memory_space<vmem>>, vector<1x128x512xf32>
      %70 = vector.shape_cast %69 : vector<1x128x512xf32> to vector<128x512xf32>
      %cst_47 = arith.constant dense<0.000000e+00> : vector<8x512xf32>
      %71 = tpu.matmul %68, %70, %cst_47 {dimension_numbers = #tpu.dot_dimension_numbers<[1], [0], [0], [1], [0, 0, 1, 1], [], []>} : vector<8x128xf32>, vector<128x512xf32>, vector<8x512xf32> -> vector<8x512xf32>
      %c0_48 = arith.constant 0 : index
      %c0_49 = arith.constant 0 : index
      %c0_50 = arith.constant 0 : index
      %72 = vector.load %arg5[%c0_48, %c0_49, %c0_50] : memref<1x128x512xf32, #tpu.memory_space<vmem>>, vector<1x128x512xf32>
      %73 = vector.shape_cast %72 : vector<1x128x512xf32> to vector<128x512xf32>
      %cst_51 = arith.constant dense<0.000000e+00> : vector<8x512xf32>
      %74 = tpu.matmul %arg15, %73, %cst_51 {dimension_numbers = #tpu.dot_dimension_numbers<[1], [0], [0], [1], [0, 0, 1, 1], [], []>} : vector<8x128xf32>, vector<128x512xf32>, vector<8x512xf32> -> vector<8x512xf32>
      %75 = arith.addf %71, %74 : vector<8x512xf32>
      %76 = vector.broadcast %12 : vector<1x512xf32> to vector<8x512xf32>
      %77 = arith.addf %75, %76 : vector<8x512xf32>
      %78 = vector.extract_strided_slice %77 {offsets = [0, 0], sizes = [8, 128], strides = [1, 1]} : vector<8x512xf32> to vector<8x128xf32>
      %cst_52 = arith.constant 5.000000e-01 : f32
      %79 = vector.broadcast %cst_52 : f32 to vector<8x128xf32>
      %80 = arith.mulf %79, %78 : vector<8x128xf32>
      %81 = math.tanh %80 : vector<8x128xf32>
      %cst_53 = arith.constant 1.000000e+00 : f32
      %82 = vector.broadcast %cst_53 : f32 to vector<8x128xf32>
      %83 = arith.addf %81, %82 : vector<8x128xf32>
      %cst_54 = arith.constant 5.000000e-01 : f32
      %84 = vector.broadcast %cst_54 : f32 to vector<8x128xf32>
      %85 = arith.mulf %84, %83 : vector<8x128xf32>
      %86 = vector.extract_strided_slice %77 {offsets = [0, 128], sizes = [8, 128], strides = [1, 1]} : vector<8x512xf32> to vector<8x128xf32>
      %cst_55 = arith.constant 5.000000e-01 : f32
      %87 = vector.broadcast %cst_55 : f32 to vector<8x128xf32>
      %88 = arith.mulf %87, %86 : vector<8x128xf32>
      %89 = math.tanh %88 : vector<8x128xf32>
      %cst_56 = arith.constant 1.000000e+00 : f32
      %90 = vector.broadcast %cst_56 : f32 to vector<8x128xf32>
      %91 = arith.addf %89, %90 : vector<8x128xf32>
      %cst_57 = arith.constant 5.000000e-01 : f32
      %92 = vector.broadcast %cst_57 : f32 to vector<8x128xf32>
      %93 = arith.mulf %92, %91 : vector<8x128xf32>
      %94 = vector.extract_strided_slice %77 {offsets = [0, 256], sizes = [8, 128], strides = [1, 1]} : vector<8x512xf32> to vector<8x128xf32>
      %95 = math.tanh %94 : vector<8x128xf32>
      %96 = vector.extract_strided_slice %77 {offsets = [0, 384], sizes = [8, 128], strides = [1, 1]} : vector<8x512xf32> to vector<8x128xf32>
      %cst_58 = arith.constant 5.000000e-01 : f32
      %97 = vector.broadcast %cst_58 : f32 to vector<8x128xf32>
      %98 = arith.mulf %97, %96 : vector<8x128xf32>
      %99 = math.tanh %98 : vector<8x128xf32>
      %cst_59 = arith.constant 1.000000e+00 : f32
      %100 = vector.broadcast %cst_59 : f32 to vector<8x128xf32>
      %101 = arith.addf %99, %100 : vector<8x128xf32>
      %cst_60 = arith.constant 5.000000e-01 : f32
      %102 = vector.broadcast %cst_60 : f32 to vector<8x128xf32>
      %103 = arith.mulf %102, %101 : vector<8x128xf32>
      %104 = arith.mulf %93, %arg17 : vector<8x128xf32>
      %105 = arith.mulf %85, %95 : vector<8x128xf32>
      %106 = arith.addf %104, %105 : vector<8x128xf32>
      %107 = math.tanh %106 : vector<8x128xf32>
      %108 = arith.mulf %103, %107 : vector<8x128xf32>
      %c2_i32_61 = arith.constant 2 : i32
      %109 = arith.muli %arg13, %c2_i32_61 : i32
      %c1_i32_62 = arith.constant 1 : i32
      %110 = arith.addi %109, %c1_i32_62 : i32
      %111 = arith.index_cast %110 : i32 to index
      %c0_63 = arith.constant 0 : index
      %c0_64 = arith.constant 0 : index
      %112 = vector.load %arg2[%111, %c0_63, %c0_64] : memref<8x8x512xf32, #tpu.memory_space<vmem>>, vector<1x8x512xf32>
      %113 = vector.shape_cast %112 : vector<1x8x512xf32> to vector<8x512xf32>
      %c0_65 = arith.constant 0 : index
      %c0_66 = arith.constant 0 : index
      %114 = vector.load %arg3[%c0_65, %c0_66] : memref<128x512xf32, #tpu.memory_space<vmem>>, vector<128x512xf32>
      %cst_67 = arith.constant dense<0.000000e+00> : vector<8x512xf32>
      %115 = tpu.matmul %68, %114, %cst_67 {dimension_numbers = #tpu.dot_dimension_numbers<[1], [0], [0], [1], [0, 0, 1, 1], [], []>} : vector<8x128xf32>, vector<128x512xf32>, vector<8x512xf32> -> vector<8x512xf32>
      %116 = arith.addf %113, %115 : vector<8x512xf32>
      %117 = vector.extract_strided_slice %116 {offsets = [0, 0], sizes = [8, 128], strides = [1, 1]} : vector<8x512xf32> to vector<8x128xf32>
      %cst_68 = arith.constant 5.000000e-01 : f32
      %118 = vector.broadcast %cst_68 : f32 to vector<8x128xf32>
      %119 = arith.mulf %118, %117 : vector<8x128xf32>
      %120 = math.tanh %119 : vector<8x128xf32>
      %cst_69 = arith.constant 1.000000e+00 : f32
      %121 = vector.broadcast %cst_69 : f32 to vector<8x128xf32>
      %122 = arith.addf %120, %121 : vector<8x128xf32>
      %cst_70 = arith.constant 5.000000e-01 : f32
      %123 = vector.broadcast %cst_70 : f32 to vector<8x128xf32>
      %124 = arith.mulf %123, %122 : vector<8x128xf32>
      %125 = vector.extract_strided_slice %116 {offsets = [0, 128], sizes = [8, 128], strides = [1, 1]} : vector<8x512xf32> to vector<8x128xf32>
      %cst_71 = arith.constant 5.000000e-01 : f32
      %126 = vector.broadcast %cst_71 : f32 to vector<8x128xf32>
      %127 = arith.mulf %126, %125 : vector<8x128xf32>
      %128 = math.tanh %127 : vector<8x128xf32>
      %cst_72 = arith.constant 1.000000e+00 : f32
      %129 = vector.broadcast %cst_72 : f32 to vector<8x128xf32>
      %130 = arith.addf %128, %129 : vector<8x128xf32>
      %cst_73 = arith.constant 5.000000e-01 : f32
      %131 = vector.broadcast %cst_73 : f32 to vector<8x128xf32>
      %132 = arith.mulf %131, %130 : vector<8x128xf32>
      %133 = vector.extract_strided_slice %116 {offsets = [0, 256], sizes = [8, 128], strides = [1, 1]} : vector<8x512xf32> to vector<8x128xf32>
      %134 = math.tanh %133 : vector<8x128xf32>
      %135 = vector.extract_strided_slice %116 {offsets = [0, 384], sizes = [8, 128], strides = [1, 1]} : vector<8x512xf32> to vector<8x128xf32>
      %cst_74 = arith.constant 5.000000e-01 : f32
      %136 = vector.broadcast %cst_74 : f32 to vector<8x128xf32>
      %137 = arith.mulf %136, %135 : vector<8x128xf32>
      %138 = math.tanh %137 : vector<8x128xf32>
      %cst_75 = arith.constant 1.000000e+00 : f32
      %139 = vector.broadcast %cst_75 : f32 to vector<8x128xf32>
      %140 = arith.addf %138, %139 : vector<8x128xf32>
      %cst_76 = arith.constant 5.000000e-01 : f32
      %141 = vector.broadcast %cst_76 : f32 to vector<8x128xf32>
      %142 = arith.mulf %141, %140 : vector<8x128xf32>
      %143 = arith.mulf %132, %66 : vector<8x128xf32>
      %144 = arith.mulf %124, %134 : vector<8x128xf32>
      %145 = arith.addf %143, %144 : vector<8x128xf32>
      %146 = math.tanh %145 : vector<8x128xf32>
      %147 = arith.mulf %142, %146 : vector<8x128xf32>
      %c0_77 = arith.constant 0 : index
      %c0_78 = arith.constant 0 : index
      %c0_79 = arith.constant 0 : index
      %148 = vector.load %arg4[%c0_77, %c0_78, %c0_79] : memref<1x128x512xf32, #tpu.memory_space<vmem>>, vector<1x128x512xf32>
      %149 = vector.shape_cast %148 : vector<1x128x512xf32> to vector<128x512xf32>
      %cst_80 = arith.constant dense<0.000000e+00> : vector<8x512xf32>
      %150 = tpu.matmul %147, %149, %cst_80 {dimension_numbers = #tpu.dot_dimension_numbers<[1], [0], [0], [1], [0, 0, 1, 1], [], []>} : vector<8x128xf32>, vector<128x512xf32>, vector<8x512xf32> -> vector<8x512xf32>
      %c0_81 = arith.constant 0 : index
      %c0_82 = arith.constant 0 : index
      %c0_83 = arith.constant 0 : index
      %151 = vector.load %arg5[%c0_81, %c0_82, %c0_83] : memref<1x128x512xf32, #tpu.memory_space<vmem>>, vector<1x128x512xf32>
      %152 = vector.shape_cast %151 : vector<1x128x512xf32> to vector<128x512xf32>
      %cst_84 = arith.constant dense<0.000000e+00> : vector<8x512xf32>
      %153 = tpu.matmul %108, %152, %cst_84 {dimension_numbers = #tpu.dot_dimension_numbers<[1], [0], [0], [1], [0, 0, 1, 1], [], []>} : vector<8x128xf32>, vector<128x512xf32>, vector<8x512xf32> -> vector<8x512xf32>
      %154 = arith.addf %150, %153 : vector<8x512xf32>
      %155 = vector.broadcast %12 : vector<1x512xf32> to vector<8x512xf32>
      %156 = arith.addf %154, %155 : vector<8x512xf32>
      %157 = vector.extract_strided_slice %156 {offsets = [0, 0], sizes = [8, 128], strides = [1, 1]} : vector<8x512xf32> to vector<8x128xf32>
      %cst_85 = arith.constant 5.000000e-01 : f32
      %158 = vector.broadcast %cst_85 : f32 to vector<8x128xf32>
      %159 = arith.mulf %158, %157 : vector<8x128xf32>
      %160 = math.tanh %159 : vector<8x128xf32>
      %cst_86 = arith.constant 1.000000e+00 : f32
      %161 = vector.broadcast %cst_86 : f32 to vector<8x128xf32>
      %162 = arith.addf %160, %161 : vector<8x128xf32>
      %cst_87 = arith.constant 5.000000e-01 : f32
      %163 = vector.broadcast %cst_87 : f32 to vector<8x128xf32>
      %164 = arith.mulf %163, %162 : vector<8x128xf32>
      %165 = vector.extract_strided_slice %156 {offsets = [0, 128], sizes = [8, 128], strides = [1, 1]} : vector<8x512xf32> to vector<8x128xf32>
      %cst_88 = arith.constant 5.000000e-01 : f32
      %166 = vector.broadcast %cst_88 : f32 to vector<8x128xf32>
      %167 = arith.mulf %166, %165 : vector<8x128xf32>
      %168 = math.tanh %167 : vector<8x128xf32>
      %cst_89 = arith.constant 1.000000e+00 : f32
      %169 = vector.broadcast %cst_89 : f32 to vector<8x128xf32>
      %170 = arith.addf %168, %169 : vector<8x128xf32>
      %cst_90 = arith.constant 5.000000e-01 : f32
      %171 = vector.broadcast %cst_90 : f32 to vector<8x128xf32>
      %172 = arith.mulf %171, %170 : vector<8x128xf32>
      %173 = vector.extract_strided_slice %156 {offsets = [0, 256], sizes = [8, 128], strides = [1, 1]} : vector<8x512xf32> to vector<8x128xf32>
      %174 = math.tanh %173 : vector<8x128xf32>
      %175 = vector.extract_strided_slice %156 {offsets = [0, 384], sizes = [8, 128], strides = [1, 1]} : vector<8x512xf32> to vector<8x128xf32>
      %cst_91 = arith.constant 5.000000e-01 : f32
      %176 = vector.broadcast %cst_91 : f32 to vector<8x128xf32>
      %177 = arith.mulf %176, %175 : vector<8x128xf32>
      %178 = math.tanh %177 : vector<8x128xf32>
      %cst_92 = arith.constant 1.000000e+00 : f32
      %179 = vector.broadcast %cst_92 : f32 to vector<8x128xf32>
      %180 = arith.addf %178, %179 : vector<8x128xf32>
      %cst_93 = arith.constant 5.000000e-01 : f32
      %181 = vector.broadcast %cst_93 : f32 to vector<8x128xf32>
      %182 = arith.mulf %181, %180 : vector<8x128xf32>
      %183 = arith.mulf %172, %106 : vector<8x128xf32>
      %184 = arith.mulf %164, %174 : vector<8x128xf32>
      %185 = arith.addf %183, %184 : vector<8x128xf32>
      %186 = math.tanh %185 : vector<8x128xf32>
      %187 = arith.mulf %182, %186 : vector<8x128xf32>
      scf.yield %147, %187, %145, %185 : vector<8x128xf32>, vector<8x128xf32>, vector<8x128xf32>, vector<8x128xf32>
    }
    %c4_i32_15 = arith.constant 4 : i32
    %c0_16 = arith.constant 0 : index
    %c0_17 = arith.constant 0 : index
    %c0_18 = arith.constant 0 : index
    %15 = vector.load %arg11[%c0_16, %c0_17, %c0_18] : memref<2x8x128xf32, #tpu.memory_space<vmem>>, vector<1x8x128xf32>
    %16 = vector.shape_cast %15 : vector<1x8x128xf32> to vector<8x128xf32>
    %17 = vector.shape_cast %14#0 : vector<8x128xf32> to vector<1x8x128xf32>
    tpu.vector_store %arg11[%c0_16, %c0_17, %c0_18], %17 {strides = array<i32>} : memref<2x8x128xf32, #tpu.memory_space<vmem>>, vector<1x8x128xf32>,
    %c0_19 = arith.constant 0 : index
    %c0_20 = arith.constant 0 : index
    %c0_21 = arith.constant 0 : index
    %18 = vector.load %arg12[%c0_19, %c0_20, %c0_21] : memref<2x8x128xf32, #tpu.memory_space<vmem>>, vector<1x8x128xf32>
    %19 = vector.shape_cast %18 : vector<1x8x128xf32> to vector<8x128xf32>
    %20 = vector.shape_cast %14#2 : vector<8x128xf32> to vector<1x8x128xf32>
    tpu.vector_store %arg12[%c0_19, %c0_20, %c0_21], %20 {strides = array<i32>} : memref<2x8x128xf32, #tpu.memory_space<vmem>>, vector<1x8x128xf32>,
    %c1_22 = arith.constant 1 : index
    %c0_23 = arith.constant 0 : index
    %c0_24 = arith.constant 0 : index
    %21 = vector.load %arg11[%c1_22, %c0_23, %c0_24] : memref<2x8x128xf32, #tpu.memory_space<vmem>>, vector<1x8x128xf32>
    %22 = vector.shape_cast %21 : vector<1x8x128xf32> to vector<8x128xf32>
    %23 = vector.shape_cast %14#1 : vector<8x128xf32> to vector<1x8x128xf32>
    tpu.vector_store %arg11[%c1_22, %c0_23, %c0_24], %23 {strides = array<i32>} : memref<2x8x128xf32, #tpu.memory_space<vmem>>, vector<1x8x128xf32>,
    %c1_25 = arith.constant 1 : index
    %c0_26 = arith.constant 0 : index
    %c0_27 = arith.constant 0 : index
    %24 = vector.load %arg12[%c1_25, %c0_26, %c0_27] : memref<2x8x128xf32, #tpu.memory_space<vmem>>, vector<1x8x128xf32>
    %25 = vector.shape_cast %24 : vector<1x8x128xf32> to vector<8x128xf32>
    %26 = vector.shape_cast %14#3 : vector<8x128xf32> to vector<1x8x128xf32>
    tpu.vector_store %arg12[%c1_25, %c0_26, %c0_27], %26 {strides = array<i32>} : memref<2x8x128xf32, #tpu.memory_space<vmem>>, vector<1x8x128xf32>,
    %c0_i32_28 = arith.constant 0 : i32
    %27 = arith.cmpi eq, %arg1, %c0_i32_28 : i32
    %28 = arith.extui %27 : i1 to i32
    %c0_i32_29 = arith.constant 0 : i32
    %29 = arith.cmpi ne, %28, %c0_i32_29 : i32
    scf.if %29 {
      %c0_30 = arith.constant 0 : index
      %c0_31 = arith.constant 0 : index
      %c0_32 = arith.constant 0 : index
      %30 = vector.load %arg10[%c0_30, %c0_31, %c0_32] : memref<2x8x128xf32, #tpu.memory_space<vmem>>, vector<1x8x128xf32>
      %31 = vector.shape_cast %30 : vector<1x8x128xf32> to vector<8x128xf32>
      %32 = vector.shape_cast %14#0 : vector<8x128xf32> to vector<1x8x128xf32>
      tpu.vector_store %arg10[%c0_30, %c0_31, %c0_32], %32 {strides = array<i32>} : memref<2x8x128xf32, #tpu.memory_space<vmem>>, vector<1x8x128xf32>,
      %c1_33 = arith.constant 1 : index
      %c0_34 = arith.constant 0 : index
      %c0_35 = arith.constant 0 : index
      %33 = vector.load %arg10[%c1_33, %c0_34, %c0_35] : memref<2x8x128xf32, #tpu.memory_space<vmem>>, vector<1x8x128xf32>
      %34 = vector.shape_cast %33 : vector<1x8x128xf32> to vector<8x128xf32>
      %35 = vector.shape_cast %14#1 : vector<8x128xf32> to vector<1x8x128xf32>
      tpu.vector_store %arg10[%c1_33, %c0_34, %c0_35], %35 {strides = array<i32>} : memref<2x8x128xf32, #tpu.memory_space<vmem>>, vector<1x8x128xf32>,
      %c0_36 = arith.constant 0 : index
      %c0_37 = arith.constant 0 : index
      %36 = vector.load %arg7[%c0_36, %c0_37] : memref<128x128xf32, #tpu.memory_space<vmem>>, vector<128x128xf32>
      %cst = arith.constant dense<0.000000e+00> : vector<8x128xf32>
      %37 = tpu.matmul %14#1, %36, %cst {dimension_numbers = #tpu.dot_dimension_numbers<[1], [0], [0], [1], [0, 0, 1, 1], [], []>} : vector<8x128xf32>, vector<128x128xf32>, vector<8x128xf32> -> vector<8x128xf32>
      %c0_38 = arith.constant 0 : index
      %c0_39 = arith.constant 0 : index
      %38 = vector.load %arg8[%c0_38, %c0_39] : memref<1x128xf32, #tpu.memory_space<vmem>>, vector<1x128xf32>
      %39 = vector.broadcast %38 : vector<1x128xf32> to vector<8x128xf32>
      %40 = arith.addf %37, %39 : vector<8x128xf32>
      %c0_40 = arith.constant 0 : index
      %c0_41 = arith.constant 0 : index
      %41 = vector.load %arg9[%c0_40, %c0_41] : memref<8x128xf32, #tpu.memory_space<vmem>>, vector<8x128xf32>
      tpu.vector_store %arg9[%c0_40, %c0_41], %40 {strides = array<i32>} : memref<8x128xf32, #tpu.memory_space<vmem>>, vector<8x128xf32>,
    } else {
    }
    return
  }
  func.func @transform_0(%arg0: i32, %arg1: i32) -> (i32, i32, i32) {
    %c0_i32 = arith.constant 0 : i32
    %c0_i32_0 = arith.constant 0 : i32
    return %arg1, %arg0, %c0_i32 : i32, i32, i32
  }
  func.func @transform_1(%arg0: i32, %arg1: i32) -> (i32, i32) {
    %c0_i32 = arith.constant 0 : i32
    %c0_i32_0 = arith.constant 0 : i32
    %c0_i32_1 = arith.constant 0 : i32
    return %c0_i32, %c0_i32_0 : i32, i32
  }
  func.func @transform_2(%arg0: i32, %arg1: i32) -> (i32, i32, i32) {
    %c0_i32 = arith.constant 0 : i32
    %c0_i32_0 = arith.constant 0 : i32
    %c0_i32_1 = arith.constant 0 : i32
    %c0_i32_2 = arith.constant 0 : i32
    return %c0_i32, %c0_i32_0, %c0_i32_1 : i32, i32, i32
  }
  func.func @transform_3(%arg0: i32, %arg1: i32) -> (i32, i32, i32) {
    %c0_i32 = arith.constant 0 : i32
    %c0_i32_0 = arith.constant 0 : i32
    %c0_i32_1 = arith.constant 0 : i32
    %c0_i32_2 = arith.constant 0 : i32
    return %c0_i32, %c0_i32_0, %c0_i32_1 : i32, i32, i32
  }
  func.func @transform_4(%arg0: i32, %arg1: i32) -> (i32, i32, i32) {
    %c0_i32 = arith.constant 0 : i32
    %c0_i32_0 = arith.constant 0 : i32
    %c0_i32_1 = arith.constant 0 : i32
    %c0_i32_2 = arith.constant 0 : i32
    return %c0_i32, %c0_i32_0, %c0_i32_1 : i32, i32, i32
  }
  func.func @transform_5(%arg0: i32, %arg1: i32) -> (i32, i32) {
    %c0_i32 = arith.constant 0 : i32
    %c0_i32_0 = arith.constant 0 : i32
    %c0_i32_1 = arith.constant 0 : i32
    return %c0_i32, %c0_i32_0 : i32, i32
  }
  func.func @transform_6(%arg0: i32, %arg1: i32) -> (i32, i32) {
    %c0_i32 = arith.constant 0 : i32
    %c0_i32_0 = arith.constant 0 : i32
    %c0_i32_1 = arith.constant 0 : i32
    return %c0_i32, %c0_i32_0 : i32, i32
  }
  func.func @transform_7(%arg0: i32, %arg1: i32) -> (i32, i32) {
    %c0_i32 = arith.constant 0 : i32
    %c0_i32_0 = arith.constant 0 : i32
    return %arg0, %c0_i32 : i32, i32
  }
  func.func @transform_8(%arg0: i32, %arg1: i32) -> (i32, i32, i32) {
    %c0_i32 = arith.constant 0 : i32
    %c0_i32_0 = arith.constant 0 : i32
    %c0_i32_1 = arith.constant 0 : i32
    return %c0_i32, %arg0, %c0_i32_0 : i32, i32, i32
  }
}

</mosaic_0001>

<llo_original>
// kernel: tpu_custom_call.1
$region0: #{tpu_custom_call.1}
  #allocation0 [shape = 'u32[]', space=smem, size = 0x4, offset = 0x4, fixed_abs, tag = 'smem constant byte address 0x4 - core index']
  #allocation1 [shape = 'u32[72,128]{1,0:T(1,128)}', space=vmem, size = 0x9000, scoped, tag = 'internal scratch']
  #allocation2 [shape = 'f32[2,8,128]{2,1,0:T(8,128)}', space=vmem, size = 0x2000, scoped, tag = 'scratch operand']
  #allocation3 [shape = 'f32[2,8,128]{2,1,0:T(8,128)}', space=vmem, size = 0x2000, scoped, tag = 'scratch operand']
  %s0 = inlined_call_operand.hbm [shape: f32[8,8,512], index: 0, kind: input, shape index: {}]
  %s1 = inlined_call_operand.hbm [shape: f32[128,512], index: 1, kind: input, shape index: {}]
  %s2 = inlined_call_operand.hbm [shape: f32[1,128,512], index: 2, kind: input, shape index: {}]
  %s3 = inlined_call_operand.hbm [shape: f32[1,128,512], index: 3, kind: input, shape index: {}]
  %s4 = inlined_call_operand.hbm [shape: f32[1,1,512], index: 4, kind: input, shape index: {}]
  %s5 = inlined_call_operand.hbm [shape: f32[128,128], index: 5, kind: input, shape index: {}]
  %s6 = inlined_call_operand.vmem [shape: f32[1,128], index: 6, kind: input, shape index: {}]
  %s7 = inlined_call_operand.hbm [shape: f32[8,128], index: 7, kind: output, shape index: {0}]
  %s8 = inlined_call_operand.hbm [shape: f32[2,8,128], index: 8, kind: output, shape index: {1}]
  %9 = xla_tuple %s7, %s8
  %s10 = sld [smem:[#allocation0]]
  $region85: #{tpu_custom_call.1} parent=0
    _
  %s12 = ssub.s32 1, %s10
  %s13 = scalar_select 0, %s12, %s10
  $region1: #{tpu_custom_call.1} parent=0
    #allocation4 [shape = 'u8[131072]{0}', space=vmem, size = 0x20000, scoped, tag = 'input window, operand 0, single buffered']
    #allocation5 [shape = 's32[1]{0}', space=sflag, size = 0x4, scoped, tag = 'scoped memory for tpu_custom_call.1']
    #allocation6 [shape = 's32[1]{0}', space=sflag, size = 0x4, scoped, tag = 'scoped memory for tpu_custom_call.1']
    #allocation7 [shape = 'u8[262144]{0}', space=vmem, size = 0x40000, scoped, tag = 'input window, operand 1, single buffered']
    #allocation8 [shape = 's32[1]{0}', space=sflag, size = 0x4, scoped, tag = 'scoped memory for tpu_custom_call.1']
    #allocation9 [shape = 'u8[262144]{0}', space=vmem, size = 0x40000, scoped, tag = 'input window, operand 2, single buffered']
    #allocation10 [shape = 'u8[262144]{0}', space=vmem, size = 0x40000, scoped, tag = 'input window, operand 3, single buffered']
    #allocation11 [shape = 's32[1]{0}', space=sflag, size = 0x4, scoped, tag = 'scoped memory for tpu_custom_call.1']
    #allocation12 [shape = 'u8[2048]{0}', space=vmem, size = 0x800, scoped, tag = 'input window, operand 4, single buffered']
    #allocation13 [shape = 'u8[65536]{0}', space=vmem, size = 0x10000, scoped, tag = 'input window, operand 5, single buffered']
    #allocation14 [shape = 's32[1]{0}', space=sflag, size = 0x4, scoped, tag = 'scoped memory for tpu_custom_call.1']
    #allocation15 [shape = 'u8[4096]{0}', space=vmem, size = 0x1000, scoped, tag = 'output window, operand 0, single buffered']
    #allocation16 [shape = 'u8[8192]{0}', space=vmem, size = 0x2000, scoped, tag = 'output window, operand 1, single buffered']
    #allocation17 [shape = 's32[1]{0}', space=sflag, size = 0x4, scoped, tag = 'scoped memory for tpu_custom_call.1']
    %14 = vsyncpa [#allocation5], 0
    %15 = vsyncpa [#allocation8], 0
    %16 = vsyncpa [#allocation11], 0
    %17 = vsyncpa [#allocation14], 0
    %18 = vsyncpa [#allocation6], 0
    %19 = vsyncpa [#allocation17], 0
    // Predicated region
    $region2: #{tpu_custom_call.1} parent=1 // pred_check
      _
    $region3: #{tpu_custom_call.1} parent=1 // pred_check_branch
      %21 = sbr.rel (0) target = $region5
    $region4: #{tpu_custom_call.1} parent=1 // pred_region
      %23 = vsyncadd [#allocation5], 0
      %s24 = sshll.u32 %s0, 4
      %s25 = int_to_ptr.hbm [resolvable:$true] %s24
      %s26 = sshll.u32 [#allocation4], 4
      %s27 = int_to_ptr.vmem [resolvable:$true] %s26
      %32 = dma.hbm_to_vmem [thread:$0]  %s25, 4096, %s27, [#allocation5], 512, 512, 32
    $region5: #{tpu_custom_call.1} parent=1 // pred_fallthru
      _
    // Predicated region
    $region6: #{tpu_custom_call.1} parent=1 // pred_check
      _
    $region7: #{tpu_custom_call.1} parent=1 // pred_check_branch
      %34 = sbr.rel (0) target = $region9
    $region8: #{tpu_custom_call.1} parent=1 // pred_region
      %36 = vsyncadd [#allocation8], 0
      %s37 = sshll.u32 %s1, 4
      %s38 = int_to_ptr.hbm [resolvable:$true] %s37
      %s39 = sshll.u32 [#allocation7], 4
      %s40 = int_to_ptr.vmem [resolvable:$true] %s39
      %45 = dma.hbm_to_vmem [thread:$0]  %s38, 8192, %s40, [#allocation8], 512, 512, 32
    $region9: #{tpu_custom_call.1} parent=1 // pred_fallthru
      _
    // Predicated region
    $region10: #{tpu_custom_call.1} parent=1 // pred_check
      _
    $region11: #{tpu_custom_call.1} parent=1 // pred_check_branch
      %47 = sbr.rel (0) target = $region13
    $region12: #{tpu_custom_call.1} parent=1 // pred_region
      %49 = vsyncadd [#allocation8], 0
      %s50 = sshll.u32 %s2, 4
      %s51 = int_to_ptr.hbm [resolvable:$true] %s50
      %s52 = sshll.u32 [#allocation9], 4
      %s53 = int_to_ptr.vmem [resolvable:$true] %s52
      %58 = dma.hbm_to_vmem [thread:$0]  %s51, 8192, %s53, [#allocation8], 512, 512, 32
    $region13: #{tpu_custom_call.1} parent=1 // pred_fallthru
      _
    // Predicated region
    $region14: #{tpu_custom_call.1} parent=1 // pred_check
      _
    $region15: #{tpu_custom_call.1} parent=1 // pred_check_branch
      %60 = sbr.rel (0) target = $region17
    $region16: #{tpu_custom_call.1} parent=1 // pred_region
      %62 = vsyncadd [#allocation11], 0
      %s63 = sshll.u32 %s3, 4
      %s64 = int_to_ptr.hbm [resolvable:$true] %s63
      %s65 = sshll.u32 [#allocation10], 4
      %s66 = int_to_ptr.vmem [resolvable:$true] %s65
      %71 = dma.hbm_to_vmem [thread:$0]  %s64, 8192, %s66, [#allocation11], 512, 512, 32
    $region17: #{tpu_custom_call.1} parent=1 // pred_fallthru
      _
    // Predicated region
    $region18: #{tpu_custom_call.1} parent=1 // pred_check
      _
    $region19: #{tpu_custom_call.1} parent=1 // pred_check_branch
      %73 = sbr.rel (0) target = $region21
    $region20: #{tpu_custom_call.1} parent=1 // pred_region
      %75 = vsyncadd [#allocation11], 0
      %s77 = sshll.u32 %s4, 4
      %s78 = int_to_ptr.hbm [resolvable:$true] %s77
      %s79 = sshll.u32 [#allocation12], 4
      %s80 = int_to_ptr.vmem [resolvable:$true] %s79
      %82 = dma.hbm_to_vmem [thread:$0]  %s78, 64, %s80, [#allocation11]
    $region21: #{tpu_custom_call.1} parent=1 // pred_fallthru
      _
    // Predicated region
    $region22: #{tpu_custom_call.1} parent=1 // pred_check
      _
    $region23: #{tpu_custom_call.1} parent=1 // pred_check_branch
      %84 = sbr.rel (0) target = $region25
    $region24: #{tpu_custom_call.1} parent=1 // pred_region
      %86 = vsyncadd [#allocation14], 0
      %s87 = sshll.u32 %s5, 4
      %s88 = int_to_ptr.hbm [resolvable:$true] %s87
      %s89 = sshll.u32 [#allocation13], 4
      %s90 = int_to_ptr.vmem [resolvable:$true] %s89
      %95 = dma.hbm_to_vmem [thread:$0]  %s88, 2048, %s90, [#allocation14], 128, 128, 8
    $region25: #{tpu_custom_call.1} parent=1 // pred_fallthru
      _
    // Predicated region
    $region26: #{tpu_custom_call.1} parent=1 // pred_check
      _
    $region27: #{tpu_custom_call.1} parent=1 // pred_check_branch
      %97 = sbr.rel (0) target = $region29
    $region28: #{tpu_custom_call.1} parent=1 // pred_region
      _
    $region29: #{tpu_custom_call.1} parent=1 // pred_fallthru
      _
    // Predicated region
    $region30: #{tpu_custom_call.1} parent=1 // pred_check
      _
    $region31: #{tpu_custom_call.1} parent=1 // pred_check_branch
      %99 = sbr.rel (0) target = $region33
    $region32: #{tpu_custom_call.1} parent=1 // pred_region
      %101 = dma.done [#allocation5], 4096
    $region33: #{tpu_custom_call.1} parent=1 // pred_fallthru
      _
    // Predicated region
    $region34: #{tpu_custom_call.1} parent=1 // pred_check
      _
    $region35: #{tpu_custom_call.1} parent=1 // pred_check_branch
      %103 = sbr.rel (0) target = $region37
    $region36: #{tpu_custom_call.1} parent=1 // pred_region
      %105 = dma.done [#allocation8], 8192
    $region37: #{tpu_custom_call.1} parent=1 // pred_fallthru
      _
    // Predicated region
    $region38: #{tpu_custom_call.1} parent=1 // pred_check
      _
    $region39: #{tpu_custom_call.1} parent=1 // pred_check_branch
      %107 = sbr.rel (0) target = $region41
    $region40: #{tpu_custom_call.1} parent=1 // pred_region
      %109 = dma.done [#allocation8], 8192
    $region41: #{tpu_custom_call.1} parent=1 // pred_fallthru
      _
    // Predicated region
    $region42: #{tpu_custom_call.1} parent=1 // pred_check
      _
    $region43: #{tpu_custom_call.1} parent=1 // pred_check_branch
      %111 = sbr.rel (0) target = $region45
    $region44: #{tpu_custom_call.1} parent=1 // pred_region
      %113 = dma.done [#allocation11], 8192
    $region45: #{tpu_custom_call.1} parent=1 // pred_fallthru
      _
    // Predicated region
    $region46: #{tpu_custom_call.1} parent=1 // pred_check
      _
    $region47: #{tpu_custom_call.1} parent=1 // pred_check_branch
      %115 = sbr.rel (0) target = $region49
    $region48: #{tpu_custom_call.1} parent=1 // pred_region
      %117 = dma.done [#allocation11], 64
    $region49: #{tpu_custom_call.1} parent=1 // pred_fallthru
      _
    // Predicated region
    $region50: #{tpu_custom_call.1} parent=1 // pred_check
      _
    $region51: #{tpu_custom_call.1} parent=1 // pred_check_branch
      %119 = sbr.rel (0) target = $region53
    $region52: #{tpu_custom_call.1} parent=1 // pred_region
      %121 = dma.done [#allocation14], 2048
    $region53: #{tpu_custom_call.1} parent=1 // pred_fallthru
      _
    %p122 = scmp.eq.s32.totalorder 0, 0
    // Predicated region
    $region54: #{tpu_custom_call.1} parent=1 // pred_check
      %p123 = pneg %p122
    $region55: #{tpu_custom_call.1} parent=1 // pred_check_branch
      %125 = sbr.rel (%p123) target = $region57
    $region56: #{tpu_custom_call.1} parent=1 // pred_region
      %126 = vst [vmem:[#allocation2] sm:$0xff] 0.0
      %127 = vst [vmem:[#allocation2 + $0x8] sm:$0xff] 0.0
      %128 = vst [vmem:[#allocation3] sm:$0xff] 0.0
      %129 = vst [vmem:[#allocation3 + $0x8] sm:$0xff] 0.0
    $region57: #{tpu_custom_call.1} parent=1 // pred_fallthru
      _
    %v130 = vld [vmem:[#allocation2] sm:$0xff]
    %s131 = scalar_lea.vmem [#allocation2], 8
    %v132 = vld [vmem:[%s131] sm:$0xff]
    %v133 = vld [vmem:[#allocation3] sm:$0xff]
    %s134 = scalar_lea.vmem [#allocation3], 8
    %v135 = vld [vmem:[%s134] sm:$0xff]
    %v136 = vld [vmem:[#allocation12] sm:$0xf]
    loop: start=0, step=1, limit=4
    $region58: #{tpu_custom_call.1} parent=1 // loop_pre_header
      _
    $region59: #{tpu_custom_call.1} parent=1 // loop_header
      %s138 = sphi 0, %s142
      %p139 = scmp.ge.s32.totalorder %s138, 4
      %v143 = vphi %v130, %v749
      %v144 = vphi %v132, %v931
      %v145 = vphi %v133, %v747
      %v146 = vphi %v135, %v929
    $region60: #{tpu_custom_call.1} parent=1 // loop_header_branch
      %141 = sbr.rel (%p139) target = $region64
    $region61: #{tpu_custom_call.1} parent=1 // loop_body
      %s147 = smul.u32 %s138, 2
      %s148 = smul.u32 %s147, 4
      %s149 = smul.addr %s148, 8
      %s150 = scalar_lea.vmem [#allocation4], %s149
      %v151 = vld [vmem:[%s150] sm:$0xff]
      %v152 = vld [vmem:[%s150 + $0x8] sm:$0xff]
      %v153 = vld [vmem:[%s150 + $0x10] sm:$0xff]
      %v154 = vld [vmem:[%s150 + $0x18] sm:$0xff]
      %v155 = vld [vmem:[#allocation7] sm:$0xff]
      %v156 = vld [vmem:[#allocation7 + $0x8] sm:$0xff]
      %v157 = vld [vmem:[#allocation7 + $0x10] sm:$0xff]
      %v158 = vld [vmem:[#allocation7 + $0x18] sm:$0xff]
      %v159 = vld [vmem:[#allocation7 + $0x20] sm:$0xff]
      %v160 = vld [vmem:[#allocation7 + $0x28] sm:$0xff]
      %v161 = vld [vmem:[#allocation7 + $0x30] sm:$0xff]
      %v162 = vld [vmem:[#allocation7 + $0x38] sm:$0xff]
      %v163 = vld [vmem:[#allocation7 + $0x40] sm:$0xff]
      %v164 = vld [vmem:[#allocation7 + $0x48] sm:$0xff]
      %v165 = vld [vmem:[#allocation7 + $0x50] sm:$0xff]
      %v166 = vld [vmem:[#allocation7 + $0x58] sm:$0xff]
      %v167 = vld [vmem:[#allocation7 + $0x60] sm:$0xff]
      %v168 = vld [vmem:[#allocation7 + $0x68] sm:$0xff]
      %v169 = vld [vmem:[#allocation7 + $0x70] sm:$0xff]
      %v170 = vld [vmem:[#allocation7 + $0x78] sm:$0xff]
      %v171 = vld [vmem:[#allocation7 + $0x80] sm:$0xff]
      %v172 = vld [vmem:[#allocation7 + $0x88] sm:$0xff]
      %v173 = vld [vmem:[#allocation7 + $0x90] sm:$0xff]
      %v174 = vld [vmem:[#allocation7 + $0x98] sm:$0xff]
      %v175 = vld [vmem:[#allocation7 + $0xa0] sm:$0xff]
      %v176 = vld [vmem:[#allocation7 + $0xa8] sm:$0xff]
      %v177 = vld [vmem:[#allocation7 + $0xb0] sm:$0xff]
      %v178 = vld [vmem:[#allocation7 + $0xb8] sm:$0xff]
      %v179 = vld [vmem:[#allocation7 + $0xc0] sm:$0xff]
      %v180 = vld [vmem:[#allocation7 + $0xc8] sm:$0xff]
      %v181 = vld [vmem:[#allocation7 + $0xd0] sm:$0xff]
      %v182 = vld [vmem:[#allocation7 + $0xd8] sm:$0xff]
      %v183 = vld [vmem:[#allocation7 + $0xe0] sm:$0xff]
      %v184 = vld [vmem:[#allocation7 + $0xe8] sm:$0xff]
      %v185 = vld [vmem:[#allocation7 + $0xf0] sm:$0xff]
      %v186 = vld [vmem:[#allocation7 + $0xf8] sm:$0xff]
      %v187 = vld [vmem:[#allocation7 + $0x100] sm:$0xff]
      %v188 = vld [vmem:[#allocation7 + $0x108] sm:$0xff]
      %v189 = vld [vmem:[#allocation7 + $0x110] sm:$0xff]
      %v190 = vld [vmem:[#allocation7 + $0x118] sm:$0xff]
      %v191 = vld [vmem:[#allocation7 + $0x120] sm:$0xff]
      %v192 = vld [vmem:[#allocation7 + $0x128] sm:$0xff]
      %v193 = vld [vmem:[#allocation7 + $0x130] sm:$0xff]
      %v194 = vld [vmem:[#allocation7 + $0x138] sm:$0xff]
      %v195 = vld [vmem:[#allocation7 + $0x140] sm:$0xff]
      %v196 = vld [vmem:[#allocation7 + $0x148] sm:$0xff]
      %v197 = vld [vmem:[#allocation7 + $0x150] sm:$0xff]
      %v198 = vld [vmem:[#allocation7 + $0x158] sm:$0xff]
      %v199 = vld [vmem:[#allocation7 + $0x160] sm:$0xff]
      %v200 = vld [vmem:[#allocation7 + $0x168] sm:$0xff]
      %v201 = vld [vmem:[#allocation7 + $0x170] sm:$0xff]
      %v202 = vld [vmem:[#allocation7 + $0x178] sm:$0xff]
      %v203 = vld [vmem:[#allocation7 + $0x180] sm:$0xff]
      %v204 = vld [vmem:[#allocation7 + $0x188] sm:$0xff]
      %v205 = vld [vmem:[#allocation7 + $0x190] sm:$0xff]
      %v206 = vld [vmem:[#allocation7 + $0x198] sm:$0xff]
      %v207 = vld [vmem:[#allocation7 + $0x1a0] sm:$0xff]
      %v208 = vld [vmem:[#allocation7 + $0x1a8] sm:$0xff]
      %v209 = vld [vmem:[#allocation7 + $0x1b0] sm:$0xff]
      %v210 = vld [vmem:[#allocation7 + $0x1b8] sm:$0xff]
      %v211 = vld [vmem:[#allocation7 + $0x1c0] sm:$0xff]
      %v212 = vld [vmem:[#allocation7 + $0x1c8] sm:$0xff]
      %v213 = vld [vmem:[#allocation7 + $0x1d0] sm:$0xff]
      %v214 = vld [vmem:[#allocation7 + $0x1d8] sm:$0xff]
      %v215 = vld [vmem:[#allocation7 + $0x1e0] sm:$0xff]
      %v216 = vld [vmem:[#allocation7 + $0x1e8] sm:$0xff]
      %v217 = vld [vmem:[#allocation7 + $0x1f0] sm:$0xff]
      %v218 = vld [vmem:[#allocation7 + $0x1f8] sm:$0xff]
      %219 = vmatpush.msra.mxu0 %v215
      %220 = vmatpush.msra.mxu0 %v211
      %221 = vmatpush.msra.mxu0 %v207
      %222 = vmatpush.msra.mxu0 %v203
      %223 = vmatpush.msra.mxu0 %v199
      %224 = vmatpush.msra.mxu0 %v195
      %225 = vmatpush.msra.mxu0 %v191
      %226 = vmatpush.msra.mxu0 %v187
      %227 = vmatpush.msra.mxu0 %v183
      %228 = vmatpush.msra.mxu0 %v179
      %229 = vmatpush.msra.mxu0 %v175
      %230 = vmatpush.msra.mxu0 %v171
      %231 = vmatpush.msra.mxu0 %v167
      %232 = vmatpush.msra.mxu0 %v163
      %233 = vmatpush.msra.mxu0 %v159
      %234 = vmatpush.msra.mxu0 %v155
      %235 = vmatmul.f32.gmra.mxu0 %v143
      %v236 = vpop.f32.mrf.mxu0
      %v237 = vadd.f32 0.0, %v236
      %238 = vdwg.mxu0
      %239 = vmatpush.msra.mxu0 %v216
      %240 = vmatpush.msra.mxu0 %v212
      %241 = vmatpush.msra.mxu0 %v208
      %242 = vmatpush.msra.mxu0 %v204
      %243 = vmatpush.msra.mxu0 %v200
      %244 = vmatpush.msra.mxu0 %v196
      %245 = vmatpush.msra.mxu0 %v192
      %246 = vmatpush.msra.mxu0 %v188
      %247 = vmatpush.msra.mxu0 %v184
      %248 = vmatpush.msra.mxu0 %v180
      %249 = vmatpush.msra.mxu0 %v176
      %250 = vmatpush.msra.mxu0 %v172
      %251 = vmatpush.msra.mxu0 %v168
      %252 = vmatpush.msra.mxu0 %v164
      %253 = vmatpush.msra.mxu0 %v160
      %254 = vmatpush.msra.mxu0 %v156
      %255 = vmatmul.f32.gmra.mxu0 %v143
      %v256 = vpop.f32.mrf.mxu0
      %v257 = vadd.f32 0.0, %v256
      %258 = vdwg.mxu0
      %259 = vmatpush.msra.mxu0 %v217
      %260 = vmatpush.msra.mxu0 %v213
      %261 = vmatpush.msra.mxu0 %v209
      %262 = vmatpush.msra.mxu0 %v205
      %263 = vmatpush.msra.mxu0 %v201
      %264 = vmatpush.msra.mxu0 %v197
      %265 = vmatpush.msra.mxu0 %v193
      %266 = vmatpush.msra.mxu0 %v189
      %267 = vmatpush.msra.mxu0 %v185
      %268 = vmatpush.msra.mxu0 %v181
      %269 = vmatpush.msra.mxu0 %v177
      %270 = vmatpush.msra.mxu0 %v173
      %271 = vmatpush.msra.mxu0 %v169
      %272 = vmatpush.msra.mxu0 %v165
      %273 = vmatpush.msra.mxu0 %v161
      %274 = vmatpush.msra.mxu0 %v157
      %275 = vmatmul.f32.gmra.mxu0 %v143
      %v276 = vpop.f32.mrf.mxu0
      %v277 = vadd.f32 0.0, %v276
      %278 = vdwg.mxu0
      %279 = vmatpush.msra.mxu0 %v218
      %280 = vmatpush.msra.mxu0 %v214
      %281 = vmatpush.msra.mxu0 %v210
      %282 = vmatpush.msra.mxu0 %v206
      %283 = vmatpush.msra.mxu0 %v202
      %284 = vmatpush.msra.mxu0 %v198
      %285 = vmatpush.msra.mxu0 %v194
      %286 = vmatpush.msra.mxu0 %v190
      %287 = vmatpush.msra.mxu0 %v186
      %288 = vmatpush.msra.mxu0 %v182
      %289 = vmatpush.msra.mxu0 %v178
      %290 = vmatpush.msra.mxu0 %v174
      %291 = vmatpush.msra.mxu0 %v170
      %292 = vmatpush.msra.mxu0 %v166
      %293 = vmatpush.msra.mxu0 %v162
      %294 = vmatpush.msra.mxu0 %v158
      %295 = vmatmul.f32.gmra.mxu0 %v143
      %v296 = vpop.f32.mrf.mxu0
      %v297 = vadd.f32 0.0, %v296
      %298 = vdwg.mxu0
      %v299 = vadd.f32 %v151, %v237
      %v300 = vadd.f32 %v152, %v257
      %v301 = vadd.f32 %v153, %v277
      %v302 = vadd.f32 %v154, %v297
      %v303 = vmul.f32 %v299, 0.5
      %v304 = vtanh.pop %v303
      %v305 = vadd.f32 %v304, 1.0
      %v306 = vmul.f32 %v305, 0.5
      %v307 = vmul.f32 %v300, 0.5
      %v308 = vtanh.pop %v307
      %v309 = vadd.f32 %v308, 1.0
      %v310 = vmul.f32 %v309, 0.5
      %v311 = vtanh.pop %v301
      %v312 = vmul.f32 %v302, 0.5
      %v313 = vtanh.pop %v312
      %v314 = vadd.f32 %v313, 1.0
      %v315 = vmul.f32 %v314, 0.5
      %v316 = vmul.f32 %v310, %v145
      %v317 = vmul.f32 %v306, %v311
      %v318 = vadd.f32 %v316, %v317
      %v319 = vtanh.pop %v318
      %v320 = vmul.f32 %v315, %v319
      %v321 = vld [vmem:[#allocation9] sm:$0xff]
      %v322 = vld [vmem:[#allocation9 + $0x8] sm:$0xff]
      %v323 = vld [vmem:[#allocation9 + $0x10] sm:$0xff]
      %v324 = vld [vmem:[#allocation9 + $0x18] sm:$0xff]
      %v325 = vld [vmem:[#allocation9 + $0x20] sm:$0xff]
      %v326 = vld [vmem:[#allocation9 + $0x28] sm:$0xff]
      %v327 = vld [vmem:[#allocation9 + $0x30] sm:$0xff]
      %v328 = vld [vmem:[#allocation9 + $0x38] sm:$0xff]
      %v329 = vld [vmem:[#allocation9 + $0x40] sm:$0xff]
      %v330 = vld [vmem:[#allocation9 + $0x48] sm:$0xff]
      %v331 = vld [vmem:[#allocation9 + $0x50] sm:$0xff]
      %v332 = vld [vmem:[#allocation9 + $0x58] sm:$0xff]
      %v333 = vld [vmem:[#allocation9 + $0x60] sm:$0xff]
      %v334 = vld [vmem:[#allocation9 + $0x68] sm:$0xff]
      %v335 = vld [vmem:[#allocation9 + $0x70] sm:$0xff]
      %v336 = vld [vmem:[#allocation9 + $0x78] sm:$0xff]
      %v337 = vld [vmem:[#allocation9 + $0x80] sm:$0xff]
      %v338 = vld [vmem:[#allocation9 + $0x88] sm:$0xff]
      %v339 = vld [vmem:[#allocation9 + $0x90] sm:$0xff]
      %v340 = vld [vmem:[#allocation9 + $0x98] sm:$0xff]
      %v341 = vld [vmem:[#allocation9 + $0xa0] sm:$0xff]
      %v342 = vld [vmem:[#allocation9 + $0xa8] sm:$0xff]
      %v343 = vld [vmem:[#allocation9 + $0xb0] sm:$0xff]
      %v344 = vld [vmem:[#allocation9 + $0xb8] sm:$0xff]
      %v345 = vld [vmem:[#allocation9 + $0xc0] sm:$0xff]
      %v346 = vld [vmem:[#allocation9 + $0xc8] sm:$0xff]
      %v347 = vld [vmem:[#allocation9 + $0xd0] sm:$0xff]
      %v348 = vld [vmem:[#allocation9 + $0xd8] sm:$0xff]
      %v349 = vld [vmem:[#allocation9 + $0xe0] sm:$0xff]
      %v350 = vld [vmem:[#allocation9 + $0xe8] sm:$0xff]
      %v351 = vld [vmem:[#allocation9 + $0xf0] sm:$0xff]
      %v352 = vld [vmem:[#allocation9 + $0xf8] sm:$0xff]
      %v353 = vld [vmem:[#allocation9 + $0x100] sm:$0xff]
      %v354 = vld [vmem:[#allocation9 + $0x108] sm:$0xff]
      %v355 = vld [vmem:[#allocation9 + $0x110] sm:$0xff]
      %v356 = vld [vmem:[#allocation9 + $0x118] sm:$0xff]
      %v357 = vld [vmem:[#allocation9 + $0x120] sm:$0xff]
      %v358 = vld [vmem:[#allocation9 + $0x128] sm:$0xff]
      %v359 = vld [vmem:[#allocation9 + $0x130] sm:$0xff]
      %v360 = vld [vmem:[#allocation9 + $0x138] sm:$0xff]
      %v361 = vld [vmem:[#allocation9 + $0x140] sm:$0xff]
      %v362 = vld [vmem:[#allocation9 + $0x148] sm:$0xff]
      %v363 = vld [vmem:[#allocation9 + $0x150] sm:$0xff]
      %v364 = vld [vmem:[#allocation9 + $0x158] sm:$0xff]
      %v365 = vld [vmem:[#allocation9 + $0x160] sm:$0xff]
      %v366 = vld [vmem:[#allocation9 + $0x168] sm:$0xff]
      %v367 = vld [vmem:[#allocation9 + $0x170] sm:$0xff]
      %v368 = vld [vmem:[#allocation9 + $0x178] sm:$0xff]
      %v369 = vld [vmem:[#allocation9 + $0x180] sm:$0xff]
      %v370 = vld [vmem:[#allocation9 + $0x188] sm:$0xff]
      %v371 = vld [vmem:[#allocation9 + $0x190] sm:$0xff]
      %v372 = vld [vmem:[#allocation9 + $0x198] sm:$0xff]
      %v373 = vld [vmem:[#allocation9 + $0x1a0] sm:$0xff]
      %v374 = vld [vmem:[#allocation9 + $0x1a8] sm:$0xff]
      %v375 = vld [vmem:[#allocation9 + $0x1b0] sm:$0xff]
      %v376 = vld [vmem:[#allocation9 + $0x1b8] sm:$0xff]
      %v377 = vld [vmem:[#allocation9 + $0x1c0] sm:$0xff]
      %v378 = vld [vmem:[#allocation9 + $0x1c8] sm:$0xff]
      %v379 = vld [vmem:[#allocation9 + $0x1d0] sm:$0xff]
      %v380 = vld [vmem:[#allocation9 + $0x1d8] sm:$0xff]
      %v381 = vld [vmem:[#allocation9 + $0x1e0] sm:$0xff]
      %v382 = vld [vmem:[#allocation9 + $0x1e8] sm:$0xff]
      %v383 = vld [vmem:[#allocation9 + $0x1f0] sm:$0xff]
      %v384 = vld [vmem:[#allocation9 + $0x1f8] sm:$0xff]
      %v385 = vld [vmem:[#allocation10] sm:$0xff]
      %v386 = vld [vmem:[#allocation10 + $0x8] sm:$0xff]
      %v387 = vld [vmem:[#allocation10 + $0x10] sm:$0xff]
      %v388 = vld [vmem:[#allocation10 + $0x18] sm:$0xff]
      %v389 = vld [vmem:[#allocation10 + $0x20] sm:$0xff]
      %v390 = vld [vmem:[#allocation10 + $0x28] sm:$0xff]
      %v391 = vld [vmem:[#allocation10 + $0x30] sm:$0xff]
      %v392 = vld [vmem:[#allocation10 + $0x38] sm:$0xff]
      %v393 = vld [vmem:[#allocation10 + $0x40] sm:$0xff]
      %v394 = vld [vmem:[#allocation10 + $0x48] sm:$0xff]
      %v395 = vld [vmem:[#allocation10 + $0x50] sm:$0xff]
      %v396 = vld [vmem:[#allocation10 + $0x58] sm:$0xff]
      %v397 = vld [vmem:[#allocation10 + $0x60] sm:$0xff]
      %v398 = vld [vmem:[#allocation10 + $0x68] sm:$0xff]
      %v399 = vld [vmem:[#allocation10 + $0x70] sm:$0xff]
      %v400 = vld [vmem:[#allocation10 + $0x78] sm:$0xff]
      %v401 = vld [vmem:[#allocation10 + $0x80] sm:$0xff]
      %v402 = vld [vmem:[#allocation10 + $0x88] sm:$0xff]
      %v403 = vld [vmem:[#allocation10 + $0x90] sm:$0xff]
      %v404 = vld [vmem:[#allocation10 + $0x98] sm:$0xff]
      %v405 = vld [vmem:[#allocation10 + $0xa0] sm:$0xff]
      %v406 = vld [vmem:[#allocation10 + $0xa8] sm:$0xff]
      %v407 = vld [vmem:[#allocation10 + $0xb0] sm:$0xff]
      %v408 = vld [vmem:[#allocation10 + $0xb8] sm:$0xff]
      %v409 = vld [vmem:[#allocation10 + $0xc0] sm:$0xff]
      %v410 = vld [vmem:[#allocation10 + $0xc8] sm:$0xff]
      %v411 = vld [vmem:[#allocation10 + $0xd0] sm:$0xff]
      %v412 = vld [vmem:[#allocation10 + $0xd8] sm:$0xff]
      %v413 = vld [vmem:[#allocation10 + $0xe0] sm:$0xff]
      %v414 = vld [vmem:[#allocation10 + $0xe8] sm:$0xff]
      %v415 = vld [vmem:[#allocation10 + $0xf0] sm:$0xff]
      %v416 = vld [vmem:[#allocation10 + $0xf8] sm:$0xff]
      %v417 = vld [vmem:[#allocation10 + $0x100] sm:$0xff]
      %v418 = vld [vmem:[#allocation10 + $0x108] sm:$0xff]
      %v419 = vld [vmem:[#allocation10 + $0x110] sm:$0xff]
      %v420 = vld [vmem:[#allocation10 + $0x118] sm:$0xff]
      %v421 = vld [vmem:[#allocation10 + $0x120] sm:$0xff]
      %v422 = vld [vmem:[#allocation10 + $0x128] sm:$0xff]
      %v423 = vld [vmem:[#allocation10 + $0x130] sm:$0xff]
      %v424 = vld [vmem:[#allocation10 + $0x138] sm:$0xff]
      %v425 = vld [vmem:[#allocation10 + $0x140] sm:$0xff]
      %v426 = vld [vmem:[#allocation10 + $0x148] sm:$0xff]
      %v427 = vld [vmem:[#allocation10 + $0x150] sm:$0xff]
      %v428 = vld [vmem:[#allocation10 + $0x158] sm:$0xff]
      %v429 = vld [vmem:[#allocation10 + $0x160] sm:$0xff]
      %v430 = vld [vmem:[#allocation10 + $0x168] sm:$0xff]
      %v431 = vld [vmem:[#allocation10 + $0x170] sm:$0xff]
      %v432 = vld [vmem:[#allocation10 + $0x178] sm:$0xff]
      %v433 = vld [vmem:[#allocation10 + $0x180] sm:$0xff]
      %v434 = vld [vmem:[#allocation10 + $0x188] sm:$0xff]
      %v435 = vld [vmem:[#allocation10 + $0x190] sm:$0xff]
      %v436 = vld [vmem:[#allocation10 + $0x198] sm:$0xff]
      %v437 = vld [vmem:[#allocation10 + $0x1a0] sm:$0xff]
      %v438 = vld [vmem:[#allocation10 + $0x1a8] sm:$0xff]
      %v439 = vld [vmem:[#allocation10 + $0x1b0] sm:$0xff]
      %v440 = vld [vmem:[#allocation10 + $0x1b8] sm:$0xff]
      %v441 = vld [vmem:[#allocation10 + $0x1c0] sm:$0xff]
      %v442 = vld [vmem:[#allocation10 + $0x1c8] sm:$0xff]
      %v443 = vld [vmem:[#allocation10 + $0x1d0] sm:$0xff]
      %v444 = vld [vmem:[#allocation10 + $0x1d8] sm:$0xff]
      %v445 = vld [vmem:[#allocation10 + $0x1e0] sm:$0xff]
      %v446 = vld [vmem:[#allocation10 + $0x1e8] sm:$0xff]
      %v447 = vld [vmem:[#allocation10 + $0x1f0] sm:$0xff]
      %v448 = vld [vmem:[#allocation10 + $0x1f8] sm:$0xff]
      %449 = vmatpush.msra.mxu0 %v445
      %450 = vmatpush.msra.mxu0 %v441
      %451 = vmatpush.msra.mxu0 %v437
      %452 = vmatpush.msra.mxu0 %v433
      %453 = vmatpush.msra.mxu0 %v429
      %454 = vmatpush.msra.mxu0 %v425
      %455 = vmatpush.msra.mxu0 %v421
      %456 = vmatpush.msra.mxu0 %v417
      %457 = vmatpush.msra.mxu0 %v413
      %458 = vmatpush.msra.mxu0 %v409
      %459 = vmatpush.msra.mxu0 %v405
      %460 = vmatpush.msra.mxu0 %v401
      %461 = vmatpush.msra.mxu0 %v397
      %462 = vmatpush.msra.mxu0 %v393
      %463 = vmatpush.msra.mxu0 %v389
      %464 = vmatpush.msra.mxu0 %v385
      %465 = vmatmul.f32.gmra.mxu0 %v144
      %v466 = vpop.f32.mrf.mxu0
      %v467 = vadd.f32 0.0, %v466
      %468 = vdwg.mxu0
      %469 = vmatpush.msra.mxu0 %v446
      %470 = vmatpush.msra.mxu0 %v442
      %471 = vmatpush.msra.mxu0 %v438
      %472 = vmatpush.msra.mxu0 %v434
      %473 = vmatpush.msra.mxu0 %v430
      %474 = vmatpush.msra.mxu0 %v426
      %475 = vmatpush.msra.mxu0 %v422
      %476 = vmatpush.msra.mxu0 %v418
      %477 = vmatpush.msra.mxu0 %v414
      %478 = vmatpush.msra.mxu0 %v410
      %479 = vmatpush.msra.mxu0 %v406
      %480 = vmatpush.msra.mxu0 %v402
      %481 = vmatpush.msra.mxu0 %v398
      %482 = vmatpush.msra.mxu0 %v394
      %483 = vmatpush.msra.mxu0 %v390
      %484 = vmatpush.msra.mxu0 %v386
      %485 = vmatmul.f32.gmra.mxu0 %v144
      %v486 = vpop.f32.mrf.mxu0
      %v487 = vadd.f32 0.0, %v486
      %488 = vdwg.mxu0
      %489 = vmatpush.msra.mxu0 %v447
      %490 = vmatpush.msra.mxu0 %v443
      %491 = vmatpush.msra.mxu0 %v439
      %492 = vmatpush.msra.mxu0 %v435
      %493 = vmatpush.msra.mxu0 %v431
      %494 = vmatpush.msra.mxu0 %v427
      %495 = vmatpush.msra.mxu0 %v423
      %496 = vmatpush.msra.mxu0 %v419
      %497 = vmatpush.msra.mxu0 %v415
      %498 = vmatpush.msra.mxu0 %v411
      %499 = vmatpush.msra.mxu0 %v407
      %500 = vmatpush.msra.mxu0 %v403
      %501 = vmatpush.msra.mxu0 %v399
      %502 = vmatpush.msra.mxu0 %v395
      %503 = vmatpush.msra.mxu0 %v391
      %504 = vmatpush.msra.mxu0 %v387
      %505 = vmatmul.f32.gmra.mxu0 %v144
      %v506 = vpop.f32.mrf.mxu0
      %v507 = vadd.f32 0.0, %v506
      %508 = vdwg.mxu0
      %509 = vmatpush.msra.mxu0 %v448
      %510 = vmatpush.msra.mxu0 %v444
      %511 = vmatpush.msra.mxu0 %v440
      %512 = vmatpush.msra.mxu0 %v436
      %513 = vmatpush.msra.mxu0 %v432
      %514 = vmatpush.msra.mxu0 %v428
      %515 = vmatpush.msra.mxu0 %v424
      %516 = vmatpush.msra.mxu0 %v420
      %517 = vmatpush.msra.mxu0 %v416
      %518 = vmatpush.msra.mxu0 %v412
      %519 = vmatpush.msra.mxu0 %v408
      %520 = vmatpush.msra.mxu0 %v404
      %521 = vmatpush.msra.mxu0 %v400
      %522 = vmatpush.msra.mxu0 %v396
      %523 = vmatpush.msra.mxu0 %v392
      %524 = vmatpush.msra.mxu0 %v388
      %525 = vmatmul.f32.gmra.mxu0 %v144
      %v526 = vpop.f32.mrf.mxu0
      %v527 = vadd.f32 0.0, %v526
      %528 = vdwg.mxu0
      %529 = vmatpush.msra.mxu0 %v381
      %530 = vmatpush.msra.mxu0 %v377
      %531 = vmatpush.msra.mxu0 %v373
      %532 = vmatpush.msra.mxu0 %v369
      %533 = vmatpush.msra.mxu0 %v365
      %534 = vmatpush.msra.mxu0 %v361
      %535 = vmatpush.msra.mxu0 %v357
      %536 = vmatpush.msra.mxu0 %v353
      %537 = vmatpush.msra.mxu0 %v349
      %538 = vmatpush.msra.mxu0 %v345
      %539 = vmatpush.msra.mxu0 %v341
      %540 = vmatpush.msra.mxu0 %v337
      %541 = vmatpush.msra.mxu0 %v333
      %542 = vmatpush.msra.mxu0 %v329
      %543 = vmatpush.msra.mxu0 %v325
      %544 = vmatpush.msra.mxu0 %v321
      %545 = vmatmul.f32.gmra.mxu0 %v320
      %v546 = vpop.f32.mrf.mxu0
      %v547 = vadd.f32 %v467, %v546
      %548 = vdwg.mxu0
      %549 = vmatpush.msra.mxu0 %v382
      %550 = vmatpush.msra.mxu0 %v378
      %551 = vmatpush.msra.mxu0 %v374
      %552 = vmatpush.msra.mxu0 %v370
      %553 = vmatpush.msra.mxu0 %v366
      %554 = vmatpush.msra.mxu0 %v362
      %555 = vmatpush.msra.mxu0 %v358
      %556 = vmatpush.msra.mxu0 %v354
      %557 = vmatpush.msra.mxu0 %v350
      %558 = vmatpush.msra.mxu0 %v346
      %559 = vmatpush.msra.mxu0 %v342
      %560 = vmatpush.msra.mxu0 %v338
      %561 = vmatpush.msra.mxu0 %v334
      %562 = vmatpush.msra.mxu0 %v330
      %563 = vmatpush.msra.mxu0 %v326
      %564 = vmatpush.msra.mxu0 %v322
      %565 = vmatmul.f32.gmra.mxu0 %v320
      %v566 = vpop.f32.mrf.mxu0
      %v567 = vadd.f32 %v487, %v566
      %568 = vdwg.mxu0
      %569 = vmatpush.msra.mxu0 %v383
      %570 = vmatpush.msra.mxu0 %v379
      %571 = vmatpush.msra.mxu0 %v375
      %572 = vmatpush.msra.mxu0 %v371
      %573 = vmatpush.msra.mxu0 %v367
      %574 = vmatpush.msra.mxu0 %v363
      %575 = vmatpush.msra.mxu0 %v359
      %576 = vmatpush.msra.mxu0 %v355
      %577 = vmatpush.msra.mxu0 %v351
      %578 = vmatpush.msra.mxu0 %v347
      %579 = vmatpush.msra.mxu0 %v343
      %580 = vmatpush.msra.mxu0 %v339
      %581 = vmatpush.msra.mxu0 %v335
      %582 = vmatpush.msra.mxu0 %v331
      %583 = vmatpush.msra.mxu0 %v327
      %584 = vmatpush.msra.mxu0 %v323
      %585 = vmatmul.f32.gmra.mxu0 %v320
      %v586 = vpop.f32.mrf.mxu0
      %v587 = vadd.f32 %v507, %v586
      %588 = vdwg.mxu0
      %589 = vmatpush.msra.mxu0 %v384
      %590 = vmatpush.msra.mxu0 %v380
      %591 = vmatpush.msra.mxu0 %v376
      %592 = vmatpush.msra.mxu0 %v372
      %593 = vmatpush.msra.mxu0 %v368
      %594 = vmatpush.msra.mxu0 %v364
      %595 = vmatpush.msra.mxu0 %v360
      %596 = vmatpush.msra.mxu0 %v356
      %597 = vmatpush.msra.mxu0 %v352
      %598 = vmatpush.msra.mxu0 %v348
      %599 = vmatpush.msra.mxu0 %v344
      %600 = vmatpush.msra.mxu0 %v340
      %601 = vmatpush.msra.mxu0 %v336
      %602 = vmatpush.msra.mxu0 %v332
      %603 = vmatpush.msra.mxu0 %v328
      %604 = vmatpush.msra.mxu0 %v324
      %605 = vmatmul.f32.gmra.mxu0 %v320
      %v606 = vpop.f32.mrf.mxu0
      %v607 = vadd.f32 %v527, %v606
      %608 = vdwg.mxu0
      %v610 = vperm.slane %v136, 0
      %v611 = vperm.slane %v136, 1
      %v612 = vperm.slane %v136, 2
      %v613 = vperm.slane %v136, 3
      %v618 = vadd.f32 %v547, %v610
      %v619 = vadd.f32 %v567, %v611
      %v620 = vadd.f32 %v587, %v612
      %v621 = vadd.f32 %v607, %v613
      %v622 = vmul.f32 %v618, 0.5
      %v623 = vtanh.pop %v622
      %v624 = vadd.f32 %v623, 1.0
      %v625 = vmul.f32 %v624, 0.5
      %v626 = vmul.f32 %v619, 0.5
      %v627 = vtanh.pop %v626
      %v628 = vadd.f32 %v627, 1.0
      %v629 = vmul.f32 %v628, 0.5
      %v630 = vtanh.pop %v620
      %v631 = vmul.f32 %v621, 0.5
      %v632 = vtanh.pop %v631
      %v633 = vadd.f32 %v632, 1.0
      %v634 = vmul.f32 %v633, 0.5
      %v635 = vmul.f32 %v629, %v146
      %v636 = vmul.f32 %v625, %v630
      %v637 = vadd.f32 %v635, %v636
      %v638 = vtanh.pop %v637
      %v639 = vmul.f32 %v634, %v638
      %s640 = sadd.s32 %s147, 1
      %s641 = smul.u32 %s640, 4
      %s642 = smul.addr %s641, 8
      %s643 = scalar_lea.vmem [#allocation4], %s642
      %v644 = vld [vmem:[%s643] sm:$0xff]
      %v645 = vld [vmem:[%s643 + $0x8] sm:$0xff]
      %v646 = vld [vmem:[%s643 + $0x10] sm:$0xff]
      %v647 = vld [vmem:[%s643 + $0x18] sm:$0xff]
      %648 = vmatpush.msra.mxu0 %v215
      %649 = vmatpush.msra.mxu0 %v211
      %650 = vmatpush.msra.mxu0 %v207
      %651 = vmatpush.msra.mxu0 %v203
      %652 = vmatpush.msra.mxu0 %v199
      %653 = vmatpush.msra.mxu0 %v195
      %654 = vmatpush.msra.mxu0 %v191
      %655 = vmatpush.msra.mxu0 %v187
      %656 = vmatpush.msra.mxu0 %v183
      %657 = vmatpush.msra.mxu0 %v179
      %658 = vmatpush.msra.mxu0 %v175
      %659 = vmatpush.msra.mxu0 %v171
      %660 = vmatpush.msra.mxu0 %v167
      %661 = vmatpush.msra.mxu0 %v163
      %662 = vmatpush.msra.mxu0 %v159
      %663 = vmatpush.msra.mxu0 %v155
      %664 = vmatmul.f32.gmra.mxu0 %v320
      %v665 = vpop.f32.mrf.mxu0
      %v666 = vadd.f32 0.0, %v665
      %667 = vdwg.mxu0
      %668 = vmatpush.msra.mxu0 %v216
      %669 = vmatpush.msra.mxu0 %v212
      %670 = vmatpush.msra.mxu0 %v208
      %671 = vmatpush.msra.mxu0 %v204
      %672 = vmatpush.msra.mxu0 %v200
      %673 = vmatpush.msra.mxu0 %v196
      %674 = vmatpush.msra.mxu0 %v192
      %675 = vmatpush.msra.mxu0 %v188
      %676 = vmatpush.msra.mxu0 %v184
      %677 = vmatpush.msra.mxu0 %v180
      %678 = vmatpush.msra.mxu0 %v176
      %679 = vmatpush.msra.mxu0 %v172
      %680 = vmatpush.msra.mxu0 %v168
      %681 = vmatpush.msra.mxu0 %v164
      %682 = vmatpush.msra.mxu0 %v160
      %683 = vmatpush.msra.mxu0 %v156
      %684 = vmatmul.f32.gmra.mxu0 %v320
      %v685 = vpop.f32.mrf.mxu0
      %v686 = vadd.f32 0.0, %v685
      %687 = vdwg.mxu0
      %688 = vmatpush.msra.mxu0 %v217
      %689 = vmatpush.msra.mxu0 %v213
      %690 = vmatpush.msra.mxu0 %v209
      %691 = vmatpush.msra.mxu0 %v205
      %692 = vmatpush.msra.mxu0 %v201
      %693 = vmatpush.msra.mxu0 %v197
      %694 = vmatpush.msra.mxu0 %v193
      %695 = vmatpush.msra.mxu0 %v189
      %696 = vmatpush.msra.mxu0 %v185
      %697 = vmatpush.msra.mxu0 %v181
      %698 = vmatpush.msra.mxu0 %v177
      %699 = vmatpush.msra.mxu0 %v173
      %700 = vmatpush.msra.mxu0 %v169
      %701 = vmatpush.msra.mxu0 %v165
      %702 = vmatpush.msra.mxu0 %v161
      %703 = vmatpush.msra.mxu0 %v157
      %704 = vmatmul.f32.gmra.mxu0 %v320
      %v705 = vpop.f32.mrf.mxu0
      %v706 = vadd.f32 0.0, %v705
      %707 = vdwg.mxu0
      %708 = vmatpush.msra.mxu0 %v218
      %709 = vmatpush.msra.mxu0 %v214
      %710 = vmatpush.msra.mxu0 %v210
      %711 = vmatpush.msra.mxu0 %v206
      %712 = vmatpush.msra.mxu0 %v202
      %713 = vmatpush.msra.mxu0 %v198
      %714 = vmatpush.msra.mxu0 %v194
      %715 = vmatpush.msra.mxu0 %v190
      %716 = vmatpush.msra.mxu0 %v186
      %717 = vmatpush.msra.mxu0 %v182
      %718 = vmatpush.msra.mxu0 %v178
      %719 = vmatpush.msra.mxu0 %v174
      %720 = vmatpush.msra.mxu0 %v170
      %721 = vmatpush.msra.mxu0 %v166
      %722 = vmatpush.msra.mxu0 %v162
      %723 = vmatpush.msra.mxu0 %v158
      %724 = vmatmul.f32.gmra.mxu0 %v320
      %v725 = vpop.f32.mrf.mxu0
      %v726 = vadd.f32 0.0, %v725
      %727 = vdwg.mxu0
      %v728 = vadd.f32 %v644, %v666
      %v729 = vadd.f32 %v645, %v686
      %v730 = vadd.f32 %v646, %v706
      %v731 = vadd.f32 %v647, %v726
      %v732 = vmul.f32 %v728, 0.5
      %v733 = vtanh.pop %v732
      %v734 = vadd.f32 %v733, 1.0
      %v735 = vmul.f32 %v734, 0.5
      %v736 = vmul.f32 %v729, 0.5
      %v737 = vtanh.pop %v736
      %v738 = vadd.f32 %v737, 1.0
      %v739 = vmul.f32 %v738, 0.5
      %v740 = vtanh.pop %v730
      %v741 = vmul.f32 %v731, 0.5
      %v742 = vtanh.pop %v741
      %v743 = vadd.f32 %v742, 1.0
      %v744 = vmul.f32 %v743, 0.5
      %v745 = vmul.f32 %v739, %v318
      %v746 = vmul.f32 %v735, %v740
      %v747 = vadd.f32 %v745, %v746
      %v748 = vtanh.pop %v747
      %v749 = vmul.f32 %v744, %v748
      %750 = vmatpush.msra.mxu0 %v445
      %751 = vmatpush.msra.mxu0 %v441
      %752 = vmatpush.msra.mxu0 %v437
      %753 = vmatpush.msra.mxu0 %v433
      %754 = vmatpush.msra.mxu0 %v429
      %755 = vmatpush.msra.mxu0 %v425
      %756 = vmatpush.msra.mxu0 %v421
      %757 = vmatpush.msra.mxu0 %v417
      %758 = vmatpush.msra.mxu0 %v413
      %759 = vmatpush.msra.mxu0 %v409
      %760 = vmatpush.msra.mxu0 %v405
      %761 = vmatpush.msra.mxu0 %v401
      %762 = vmatpush.msra.mxu0 %v397
      %763 = vmatpush.msra.mxu0 %v393
      %764 = vmatpush.msra.mxu0 %v389
      %765 = vmatpush.msra.mxu0 %v385
      %766 = vmatmul.f32.gmra.mxu0 %v639
      %v767 = vpop.f32.mrf.mxu0
      %v768 = vadd.f32 0.0, %v767
      %769 = vdwg.mxu0
      %770 = vmatpush.msra.mxu0 %v446
      %771 = vmatpush.msra.mxu0 %v442
      %772 = vmatpush.msra.mxu0 %v438
      %773 = vmatpush.msra.mxu0 %v434
      %774 = vmatpush.msra.mxu0 %v430
      %775 = vmatpush.msra.mxu0 %v426
      %776 = vmatpush.msra.mxu0 %v422
      %777 = vmatpush.msra.mxu0 %v418
      %778 = vmatpush.msra.mxu0 %v414
      %779 = vmatpush.msra.mxu0 %v410
      %780 = vmatpush.msra.mxu0 %v406
      %781 = vmatpush.msra.mxu0 %v402
      %782 = vmatpush.msra.mxu0 %v398
      %783 = vmatpush.msra.mxu0 %v394
      %784 = vmatpush.msra.mxu0 %v390
      %785 = vmatpush.msra.mxu0 %v386
      %786 = vmatmul.f32.gmra.mxu0 %v639
      %v787 = vpop.f32.mrf.mxu0
      %v788 = vadd.f32 0.0, %v787
      %789 = vdwg.mxu0
      %790 = vmatpush.msra.mxu0 %v447
      %791 = vmatpush.msra.mxu0 %v443
      %792 = vmatpush.msra.mxu0 %v439
      %793 = vmatpush.msra.mxu0 %v435
      %794 = vmatpush.msra.mxu0 %v431
      %795 = vmatpush.msra.mxu0 %v427
      %796 = vmatpush.msra.mxu0 %v423
      %797 = vmatpush.msra.mxu0 %v419
      %798 = vmatpush.msra.mxu0 %v415
      %799 = vmatpush.msra.mxu0 %v411
      %800 = vmatpush.msra.mxu0 %v407
      %801 = vmatpush.msra.mxu0 %v403
      %802 = vmatpush.msra.mxu0 %v399
      %803 = vmatpush.msra.mxu0 %v395
      %804 = vmatpush.msra.mxu0 %v391
      %805 = vmatpush.msra.mxu0 %v387
      %806 = vmatmul.f32.gmra.mxu0 %v639
      %v807 = vpop.f32.mrf.mxu0
      %v808 = vadd.f32 0.0, %v807
      %809 = vdwg.mxu0
      %810 = vmatpush.msra.mxu0 %v448
      %811 = vmatpush.msra.mxu0 %v444
      %812 = vmatpush.msra.mxu0 %v440
      %813 = vmatpush.msra.mxu0 %v436
      %814 = vmatpush.msra.mxu0 %v432
      %815 = vmatpush.msra.mxu0 %v428
      %816 = vmatpush.msra.mxu0 %v424
      %817 = vmatpush.msra.mxu0 %v420
      %818 = vmatpush.msra.mxu0 %v416
      %819 = vmatpush.msra.mxu0 %v412
      %820 = vmatpush.msra.mxu0 %v408
      %821 = vmatpush.msra.mxu0 %v404
      %822 = vmatpush.msra.mxu0 %v400
      %823 = vmatpush.msra.mxu0 %v396
      %824 = vmatpush.msra.mxu0 %v392
      %825 = vmatpush.msra.mxu0 %v388
      %826 = vmatmul.f32.gmra.mxu0 %v639
      %v827 = vpop.f32.mrf.mxu0
      %v828 = vadd.f32 0.0, %v827
      %829 = vdwg.mxu0
      %830 = vmatpush.msra.mxu0 %v381
      %831 = vmatpush.msra.mxu0 %v377
      %832 = vmatpush.msra.mxu0 %v373
      %833 = vmatpush.msra.mxu0 %v369
      %834 = vmatpush.msra.mxu0 %v365
      %835 = vmatpush.msra.mxu0 %v361
      %836 = vmatpush.msra.mxu0 %v357
      %837 = vmatpush.msra.mxu0 %v353
      %838 = vmatpush.msra.mxu0 %v349
      %839 = vmatpush.msra.mxu0 %v345
      %840 = vmatpush.msra.mxu0 %v341
      %841 = vmatpush.msra.mxu0 %v337
      %842 = vmatpush.msra.mxu0 %v333
      %843 = vmatpush.msra.mxu0 %v329
      %844 = vmatpush.msra.mxu0 %v325
      %845 = vmatpush.msra.mxu0 %v321
      %846 = vmatmul.f32.gmra.mxu0 %v749
      %v847 = vpop.f32.mrf.mxu0
      %v848 = vadd.f32 %v768, %v847
      %849 = vdwg.mxu0
      %850 = vmatpush.msra.mxu0 %v382
      %851 = vmatpush.msra.mxu0 %v378
      %852 = vmatpush.msra.mxu0 %v374
      %853 = vmatpush.msra.mxu0 %v370
      %854 = vmatpush.msra.mxu0 %v366
      %855 = vmatpush.msra.mxu0 %v362
      %856 = vmatpush.msra.mxu0 %v358
      %857 = vmatpush.msra.mxu0 %v354
      %858 = vmatpush.msra.mxu0 %v350
      %859 = vmatpush.msra.mxu0 %v346
      %860 = vmatpush.msra.mxu0 %v342
      %861 = vmatpush.msra.mxu0 %v338
      %862 = vmatpush.msra.mxu0 %v334
      %863 = vmatpush.msra.mxu0 %v330
      %864 = vmatpush.msra.mxu0 %v326
      %865 = vmatpush.msra.mxu0 %v322
      %866 = vmatmul.f32.gmra.mxu0 %v749
      %v867 = vpop.f32.mrf.mxu0
      %v868 = vadd.f32 %v788, %v867
      %869 = vdwg.mxu0
      %870 = vmatpush.msra.mxu0 %v383
      %871 = vmatpush.msra.mxu0 %v379
      %872 = vmatpush.msra.mxu0 %v375
      %873 = vmatpush.msra.mxu0 %v371
      %874 = vmatpush.msra.mxu0 %v367
      %875 = vmatpush.msra.mxu0 %v363
      %876 = vmatpush.msra.mxu0 %v359
      %877 = vmatpush.msra.mxu0 %v355
      %878 = vmatpush.msra.mxu0 %v351
      %879 = vmatpush.msra.mxu0 %v347
      %880 = vmatpush.msra.mxu0 %v343
      %881 = vmatpush.msra.mxu0 %v339
      %882 = vmatpush.msra.mxu0 %v335
      %883 = vmatpush.msra.mxu0 %v331
      %884 = vmatpush.msra.mxu0 %v327
      %885 = vmatpush.msra.mxu0 %v323
      %886 = vmatmul.f32.gmra.mxu0 %v749
      %v887 = vpop.f32.mrf.mxu0
      %v888 = vadd.f32 %v808, %v887
      %889 = vdwg.mxu0
      %890 = vmatpush.msra.mxu0 %v384
      %891 = vmatpush.msra.mxu0 %v380
      %892 = vmatpush.msra.mxu0 %v376
      %893 = vmatpush.msra.mxu0 %v372
      %894 = vmatpush.msra.mxu0 %v368
      %895 = vmatpush.msra.mxu0 %v364
      %896 = vmatpush.msra.mxu0 %v360
      %897 = vmatpush.msra.mxu0 %v356
      %898 = vmatpush.msra.mxu0 %v352
      %899 = vmatpush.msra.mxu0 %v348
      %900 = vmatpush.msra.mxu0 %v344
      %901 = vmatpush.msra.mxu0 %v340
      %902 = vmatpush.msra.mxu0 %v336
      %903 = vmatpush.msra.mxu0 %v332
      %904 = vmatpush.msra.mxu0 %v328
      %905 = vmatpush.msra.mxu0 %v324
      %906 = vmatmul.f32.gmra.mxu0 %v749
      %v907 = vpop.f32.mrf.mxu0
      %v908 = vadd.f32 %v828, %v907
      %909 = vdwg.mxu0
      %v910 = vadd.f32 %v848, %v610
      %v911 = vadd.f32 %v868, %v611
      %v912 = vadd.f32 %v888, %v612
      %v913 = vadd.f32 %v908, %v613
      %v914 = vmul.f32 %v910, 0.5
      %v915 = vtanh.pop %v914
      %v916 = vadd.f32 %v915, 1.0
      %v917 = vmul.f32 %v916, 0.5
      %v918 = vmul.f32 %v911, 0.5
      %v919 = vtanh.pop %v918
      %v920 = vadd.f32 %v919, 1.0
      %v921 = vmul.f32 %v920, 0.5
      %v922 = vtanh.pop %v912
      %v923 = vmul.f32 %v913, 0.5
      %v924 = vtanh.pop %v923
      %v925 = vadd.f32 %v924, 1.0
      %v926 = vmul.f32 %v925, 0.5
      %v927 = vmul.f32 %v921, %v637
      %v928 = vmul.f32 %v917, %v922
      %v929 = vadd.f32 %v927, %v928
      %v930 = vtanh.pop %v929
      %v931 = vmul.f32 %v926, %v930
    $region62: #{tpu_custom_call.1} parent=1 // loop_footer
      %s142 = sadd.s32 1, %s138
    $region63: #{tpu_custom_call.1} parent=1 // loop_footer_branch
      %137 = sbr.rel target = $region59
    $region64: #{tpu_custom_call.1} parent=1 // loop_exit
      _
    %932 = vst [vmem:[#allocation2] sm:$0xff] %v143
    %933 = vst [vmem:[#allocation3] sm:$0xff] %v145
    %934 = vst [vmem:[%s131] sm:$0xff] %v144
    %935 = vst [vmem:[%s134] sm:$0xff] %v146
    // Predicated region
    $region65: #{tpu_custom_call.1} parent=1 // pred_check
      %p936 = pneg %p122
    $region66: #{tpu_custom_call.1} parent=1 // pred_check_branch
      %938 = sbr.rel (%p936) target = $region68
    $region67: #{tpu_custom_call.1} parent=1 // pred_region
      %939 = vst [vmem:[#allocation16] sm:$0xff] %v143
      %s940 = scalar_lea.vmem [#allocation16], 8
      %941 = vst [vmem:[%s940] sm:$0xff] %v144
      %v942 = vld [vmem:[#allocation13] sm:$0xff]
      %v943 = vld [vmem:[#allocation13 + $0x8] sm:$0xff]
      %v944 = vld [vmem:[#allocation13 + $0x10] sm:$0xff]
      %v945 = vld [vmem:[#allocation13 + $0x18] sm:$0xff]
      %v946 = vld [vmem:[#allocation13 + $0x20] sm:$0xff]
      %v947 = vld [vmem:[#allocation13 + $0x28] sm:$0xff]
      %v948 = vld [vmem:[#allocation13 + $0x30] sm:$0xff]
      %v949 = vld [vmem:[#allocation13 + $0x38] sm:$0xff]
      %v950 = vld [vmem:[#allocation13 + $0x40] sm:$0xff]
      %v951 = vld [vmem:[#allocation13 + $0x48] sm:$0xff]
      %v952 = vld [vmem:[#allocation13 + $0x50] sm:$0xff]
      %v953 = vld [vmem:[#allocation13 + $0x58] sm:$0xff]
      %v954 = vld [vmem:[#allocation13 + $0x60] sm:$0xff]
      %v955 = vld [vmem:[#allocation13 + $0x68] sm:$0xff]
      %v956 = vld [vmem:[#allocation13 + $0x70] sm:$0xff]
      %v957 = vld [vmem:[#allocation13 + $0x78] sm:$0xff]
      %v958 = vld [vmem:[%s6] sm:$0x1]
      %v960 = vperm.slane %v958, 0
      %962 = vmatpush.msra.mxu0 %v957
      %963 = vmatpush.msra.mxu0 %v956
      %964 = vmatpush.msra.mxu0 %v955
      %965 = vmatpush.msra.mxu0 %v954
      %966 = vmatpush.msra.mxu0 %v953
      %967 = vmatpush.msra.mxu0 %v952
      %968 = vmatpush.msra.mxu0 %v951
      %969 = vmatpush.msra.mxu0 %v950
      %970 = vmatpush.msra.mxu0 %v949
      %971 = vmatpush.msra.mxu0 %v948
      %972 = vmatpush.msra.mxu0 %v947
      %973 = vmatpush.msra.mxu0 %v946
      %974 = vmatpush.msra.mxu0 %v945
      %975 = vmatpush.msra.mxu0 %v944
      %976 = vmatpush.msra.mxu0 %v943
      %977 = vmatpush.msra.mxu0 %v942
      %978 = vmatmul.f32.gmra.mxu0 %v144
      %v979 = vpop.f32.mrf.mxu0
      %v980 = vadd.f32 %v960, %v979
      %981 = vdwg.mxu0
      %982 = vst [vmem:[#allocation15] sm:$0xff] %v980
    $region68: #{tpu_custom_call.1} parent=1 // pred_fallthru
      _
    // Predicated region
    $region69: #{tpu_custom_call.1} parent=1 // pred_check
      _
    $region70: #{tpu_custom_call.1} parent=1 // pred_check_branch
      %984 = sbr.rel (0) target = $region72
    $region71: #{tpu_custom_call.1} parent=1 // pred_region
      %986 = vsyncadd [#allocation6], 0
      %s988 = sshll.u32 [#allocation15], 4
      %s989 = int_to_ptr.vmem [resolvable:$true] %s988
      %s990 = sshll.u32 %s7, 4
      %s991 = int_to_ptr.hbm [resolvable:$true] %s990
      %993 = dma.vmem_to_hbm [thread:$0]  %s989, 128, %s991, [#allocation6]
    $region72: #{tpu_custom_call.1} parent=1 // pred_fallthru
      _
    // Predicated region
    $region73: #{tpu_custom_call.1} parent=1 // pred_check
      _
    $region74: #{tpu_custom_call.1} parent=1 // pred_check_branch
      %995 = sbr.rel (0) target = $region76
    $region75: #{tpu_custom_call.1} parent=1 // pred_region
      %997 = vsyncadd [#allocation17], 0
      %s998 = sshll.u32 [#allocation16], 4
      %s999 = int_to_ptr.vmem [resolvable:$true] %s998
      %s1000 = sshll.u32 %s8, 4
      %s1001 = int_to_ptr.hbm [resolvable:$true] %s1000
      %1006 = dma.vmem_to_hbm [thread:$0]  %s999, 256, %s1001, [#allocation17], 128, 128, 8
    $region76: #{tpu_custom_call.1} parent=1 // pred_fallthru
      _
    // Predicated region
    $region77: #{tpu_custom_call.1} parent=1 // pred_check
      _
    $region78: #{tpu_custom_call.1} parent=1 // pred_check_branch
      %1008 = sbr.rel (0) target = $region80
    $region79: #{tpu_custom_call.1} parent=1 // pred_region
      %1010 = dma.done [#allocation6], 128
    $region80: #{tpu_custom_call.1} parent=1 // pred_fallthru
      _
    // Predicated region
    $region81: #{tpu_custom_call.1} parent=1 // pred_check
      _
    $region82: #{tpu_custom_call.1} parent=1 // pred_check_branch
      %1012 = sbr.rel (0) target = $region84
    $region83: #{tpu_custom_call.1} parent=1 // pred_region
      %1014 = dma.done [#allocation17], 256
    $region84: #{tpu_custom_call.1} parent=1 // pred_fallthru
      _
    %1015 = vsyncpa [#allocation5], 1
    %1016 = vsyncpa [#allocation8], 1
    %1017 = vsyncpa [#allocation11], 1
    %1018 = vsyncpa [#allocation14], 1
    %1019 = vsyncpa [#allocation6], 1
    %1020 = vsyncpa [#allocation17], 1

</llo_original>
